<compile_context>
chip_gen: v5e
topology: v5e:2x2
jax: 0.10.0
libtpu: 0.0.40
codegen_flags: <defaults>
</compile_context>

<pallas_src>
import functools

import jax
import jax.numpy as jnp
from jax import lax
from jax.experimental import pallas as pl
from jax.experimental.pallas import tpu as pltpu


# ----------------------------- fused Pallas kernel -----------------------------

def flow_step_kernel(x_ref, m_ref, a0_ref, w1_ref, w2_ref, c2_ref, w3_ref, c3_ref,
                     o_ref, *, W, C1p):
    """Whole FlowStep in one invocation; channel-major (padded channels x N*H*W)."""
    NP = x_ref.shape[-1]
    x = x_ref[...]                        # (Cin_p, NP)  rows: C chans, ones, zeros
    masks = m_ref[...]                    # (8, NP)      f32 boundary masks per tap

    # --- ActNorm2d + invertible 1x1 conv; biases folded via the ones row ---
    z = jnp.dot(a0_ref[...], x, preferred_element_type=jnp.float32)   # (2*C1p, NP)
    z1 = z[:C1p]                          # 8-row aligned; pad row 7 == 1.0 (bias carrier)
    z2 = z[C1p:]

    taps = [(dy, dx) for dy in (-1, 0, 1) for dx in (-1, 0, 1)]

    def conv3x3(inp, w_mat):
        # SAME 3x3 conv: 9 rolled+masked slabs -> one (9*rows, NP) VMEM slab -> one dot.
        slabs = []
        for t, (dy, dx) in enumerate(taps):
            s_px = dy * W + dx
            sh = pltpu.roll(inp, (-s_px) % NP, axis=1) if s_px else inp
            if (dy, dx) != (0, 0):
                mrow = t if t < 4 else t - 1
                sh = sh * masks[mrow]     # zero out taps that fall off the image
            slabs.append(sh)
        patches = jnp.concatenate(slabs, axis=0)
        return jnp.dot(w_mat, patches, preferred_element_type=jnp.float32)

    # --- f(z1): Conv3x3+ActNorm+ReLU -> Conv1x1+ActNorm+ReLU -> Conv3x3Zeros ---
    h1 = jnp.maximum(conv3x3(z1, w1_ref[...]), 0.0)                    # bias folded
    h2 = jnp.maximum(jnp.dot(w2_ref[...], h1, preferred_element_type=jnp.float32)
                     + c2_ref[...], 0.0)
    fz1 = conv3x3(h2, w3_ref[...]) + c3_ref[...]                       # (C1p, NP)

    # --- additive coupling + concat (8-row aligned), single full-width store ---
    o_ref[...] = jnp.concatenate([z1, z2 + fz1], axis=0)


# ----------------------------- wrapper -----------------------------

def flow_step_forward(x_nchw, logdet, params):
    """FlowStep.normal_flow (invconv permutation, additive coupling)."""
    N, C, H, W = x_nchw.shape
    assert C % 2 == 0
    C1 = C // 2
    P = H * W
    NP = N * P
    hidden = params["an1_logs"].shape[0]
    C1p = 8        # half-channel count padded to the 8-sublane granule
    Cin_p = 8      # padded input rows: C channels + 1 ones row + zero pad
    f32 = jnp.float32

    # ---- stage 0: ActNorm + invconv folded into one (2*C1p, Cin_p) matmul ----
    s0 = jnp.exp(params["actnorm_logs"])
    a0 = params["invconv_w"] * s0[None, :]                                # (C, C)
    c0 = params["invconv_w"] @ (s0 * params["actnorm_bias"])              # (C,)
    a0_full = jnp.concatenate(
        [a0, c0[:, None], jnp.zeros((C, Cin_p - C - 1), f32)], axis=1)    # (C, 8)
    ones_pick = jnp.zeros((1, Cin_p), f32).at[0, C].set(1.0)              # -> z1 row 7 = 1
    a0_aug = jnp.concatenate([
        a0_full[:C1],
        jnp.zeros((C1p - C1 - 1, Cin_p), f32),
        ones_pick,
        a0_full[C1:],
        jnp.zeros((C1p - C1, Cin_p), f32),
    ], axis=0)                                                            # (16, 8)

    # ---- conv1 (3x3, C1->hidden) + ActNorm folded; bias rides the ones pad row ----
    s1 = jnp.exp(params["an1_logs"])
    w1 = jnp.transpose(params["w1"], (3, 0, 1, 2)) * s1[:, None, None, None]
    w1m = jnp.pad(w1.reshape(hidden, 9, C1),
                  ((0, 0), (0, 0), (0, C1p - C1))).reshape(hidden, 9 * C1p)
    w1m = w1m.at[:, 4 * C1p + (C1p - 1)].set(s1 * params["an1_bias"])     # center tap, ones row

    # ---- conv2 (1x1, hidden->hidden) + ActNorm folded ----
    s2 = jnp.exp(params["an2_logs"])
    w2m = params["w2"].T * s2[:, None]                                    # (hid, hid)
    c2 = (s2 * params["an2_bias"]).reshape(hidden, 1)

    # ---- conv3 (3x3 zeros, hidden->C1) * exp(3*logs) + bias; output rows padded ----
    s3 = jnp.exp(3.0 * params["logs3"])
    w3 = jnp.transpose(params["w3"], (3, 0, 1, 2)) * s3[:, None, None, None]
    w3m = jnp.pad(w3.reshape(C1, 9 * hidden), ((0, C1p - C1), (0, 0)))    # (8, 9*hid)
    c3 = jnp.pad((s3 * params["b3"]).reshape(C1, 1), ((0, C1p - C1), (0, 0)))

    # ---- activations: channel-major, batch folded into the lane (pixel) axis ----
    x_cm = jnp.transpose(x_nchw.reshape(N, C, P), (1, 0, 2)).reshape(C, NP)
    x_aug = jnp.concatenate(
        [x_cm, jnp.ones((1, NP), f32), jnp.zeros((Cin_p - C - 1, NP), f32)], axis=0)

    # ---- 3x3 boundary masks: one f32 row per non-center tap, tiled per image ----
    pidx = jnp.arange(P, dtype=jnp.int32)
    row = pidx // W
    col = pidx % W
    taps_nc = [(dy, dx) for dy in (-1, 0, 1) for dx in (-1, 0, 1) if (dy, dx) != (0, 0)]
    mrows = []
    for dy, dx in taps_nc:
        m = jnp.ones((P,), bool)
        if dy == -1:
            m = m & (row >= 1)
        elif dy == 1:
            m = m & (row <= H - 2)
        if dx == -1:
            m = m & (col >= 1)
        elif dx == 1:
            m = m & (col <= W - 2)
        mrows.append(m)
    mask = jnp.tile(jnp.stack(mrows, 0).astype(f32), (1, N))              # (8, NP)

    kernel = functools.partial(flow_step_kernel, W=W, C1p=C1p)

    def spec2(shape):
        return pl.BlockSpec(shape, lambda i: (0, 0))

    z_pad = pl.pallas_call(
        kernel,
        out_shape=jax.ShapeDtypeStruct((2 * C1p, NP), f32),
        grid=(1,),
        in_specs=[
            spec2((Cin_p, NP)),
            spec2((8, NP)),
            spec2((2 * C1p, Cin_p)),
            spec2((hidden, 9 * C1p)),
            spec2((hidden, hidden)),
            spec2((hidden, 1)),
            spec2((C1p, 9 * hidden)),
            spec2((C1p, 1)),
        ],
        out_specs=spec2((2 * C1p, NP)),
        compiler_params=pltpu.CompilerParams(dimension_semantics=("arbitrary",)),
    )(x_aug, mask, a0_aug, w1m, w2m, c2, w3m, c3)

    # ---- unpad (drop sublane padding rows) and return to NCHW ----
    z_cm = jnp.concatenate([z_pad[:C1], z_pad[C1p:C1p + C1]], axis=0)     # (C, NP)
    z_out = jnp.transpose(z_cm.reshape(C, N, P), (1, 0, 2)).reshape(N, C, H, W)

    # Additive coupling: logdet only from ActNorm + invconv.
    # slogdet(...)[1] drops the determinant sign == Glow's log|det W| convention.
    logdet = logdet + P * (jnp.sum(params["actnorm_logs"])
                           + jnp.linalg.slogdet(params["invconv_w"])[1])
    return z_out, logdet


# ----------------------------- pure-JAX reference -----------------------------

def reference_forward(x_nchw, logdet, params):
    N, C, H, W = x_nchw.shape
    C1 = C // 2
    x = jnp.transpose(x_nchw, (0, 2, 3, 1))                      # NHWC
    z = (x + params["actnorm_bias"]) * jnp.exp(params["actnorm_logs"])
    logdet = logdet + H * W * (jnp.sum(params["actnorm_logs"])
                               + jnp.linalg.slogdet(params["invconv_w"])[1])
    z = jnp.einsum("nhwc,oc->nhwo", z, params["invconv_w"])
    z1, z2 = z[..., :C1], z[..., C1:]

    def conv3(inp, w):
        return lax.conv_general_dilated(inp, w, (1, 1), "SAME",
                                        dimension_numbers=("NHWC", "HWIO", "NHWC"))

    h = jnp.maximum((conv3(z1, params["w1"]) + params["an1_bias"])
                    * jnp.exp(params["an1_logs"]), 0.0)
    h = jnp.maximum((jnp.einsum("nhwc,co->nhwo", h, params["w2"]) + params["an2_bias"])
                    * jnp.exp(params["an2_logs"]), 0.0)
    fz1 = (conv3(h, params["w3"]) + params["b3"]) * jnp.exp(3.0 * params["logs3"])
    z2 = z2 + fz1
    z = jnp.concatenate([z1, z2], axis=-1)
    return jnp.transpose(z, (0, 3, 1, 2)), logdet


# ----------------------------- main -----------------------------

if __name__ == "__main__":
    N, C, H, W = 2, 4, 16, 16     # in_channels=4 (must be even), 16x16 spatial
    hidden = 32                   # hidden_channels
    C1 = C // 2

    key = jax.random.PRNGKey(0)
    ks = jax.random.split(key, 13)

    # Deterministic synthetic parameters (shapes per module __init__).
    # NOTE: ActNorm params / Conv2dZeros weights are zero-init in the real module
    # (data-dependent init at first forward); small nonzero values here exercise
    # the full compute path.
    # TODO(synk): ActNorm data-dependent (first-batch) initialization is not replicated.
    params = {
        "actnorm_bias": 0.1 * jax.random.normal(ks[0], (C,), jnp.float32),
        "actnorm_logs": 0.1 * jax.random.normal(ks[1], (C,), jnp.float32),
        "invconv_w": jnp.linalg.qr(jax.random.normal(ks[2], (C, C), jnp.float32))[0],
        # f: Conv2d(C1 -> hidden, 3x3, bias=False) + ActNorm   (HWIO weights)
        "w1": 0.05 * jax.random.normal(ks[3], (3, 3, C1, hidden), jnp.float32),
        "an1_bias": 0.1 * jax.random.normal(ks[4], (hidden,), jnp.float32),
        "an1_logs": 0.1 * jax.random.normal(ks[5], (hidden,), jnp.float32),
        # f: Conv2d(hidden -> hidden, 1x1, bias=False) + ActNorm
        "w2": 0.05 * jax.random.normal(ks[6], (hidden, hidden), jnp.float32),
        "an2_bias": 0.1 * jax.random.normal(ks[7], (hidden,), jnp.float32),
        "an2_logs": 0.1 * jax.random.normal(ks[8], (hidden,), jnp.float32),
        # f: Conv2dZeros(hidden -> C1, 3x3): conv + bias, * exp(3*logs)
        "w3": 0.05 * jax.random.normal(ks[9], (3, 3, hidden, C1), jnp.float32),
        "b3": 0.05 * jax.random.normal(ks[10], (C1,), jnp.float32),
        "logs3": 0.05 * jax.random.normal(ks[11], (C1,), jnp.float32),
    }

    x = jax.random.normal(ks[12], (N, C, H, W), jnp.float32)     # NCHW like PyTorch
    logdet0 = jnp.zeros((N,), jnp.float32)

    z, logdet = flow_step_forward(x, logdet0, params)
    jax.block_until_ready((z, logdet))

    z_ref, logdet_ref = reference_forward(x, logdet0, params)
    assert z.shape == x.shape and logdet.shape == (N,)
    # kernel matmuls accumulate in f32; tolerance covers MXU vs XLA-conv precision.
    assert jnp.allclose(z, z_ref, atol=1e-3, rtol=1e-3), float(jnp.max(jnp.abs(z - z_ref)))
    assert jnp.allclose(logdet, logdet_ref, atol=1e-3, rtol=1e-3)

    print("KERNEL_OK")
</pallas_src>

<mosaic_0001>
module attributes {stable_mosaic.version = 11 : i64} {
  func.func @flow_step_kernel(%arg0: i32, %arg1: memref<8x512xf32, #tpu.memory_space<vmem>>, %arg2: memref<8x512xf32, #tpu.memory_space<vmem>>, %arg3: memref<16x8xf32, #tpu.memory_space<vmem>>, %arg4: memref<32x72xf32, #tpu.memory_space<vmem>>, %arg5: memref<32x32xf32, #tpu.memory_space<vmem>>, %arg6: memref<32x1xf32, #tpu.memory_space<vmem>>, %arg7: memref<8x288xf32, #tpu.memory_space<vmem>>, %arg8: memref<8x1xf32, #tpu.memory_space<vmem>>, %arg9: memref<16x512xf32, #tpu.memory_space<vmem>>) attributes {dimension_semantics = [#tpu.dimension_semantics<arbitrary>], iteration_bounds = array<i64: 1>, scalar_prefetch = 0 : i64, scratch_operands = 0 : i64, tpu.core_type = #tpu.core_type<tc>, window_params = [{pipeline_mode = #tpu.pipeline_mode<synchronous>, transform_indices = @transform_0, window_bounds = array<i64: 8, 512>}, {pipeline_mode = #tpu.pipeline_mode<synchronous>, transform_indices = @transform_1, window_bounds = array<i64: 8, 512>}, {pipeline_mode = #tpu.pipeline_mode<synchronous>, transform_indices = @transform_2, window_bounds = array<i64: 16, 8>}, {pipeline_mode = #tpu.pipeline_mode<synchronous>, transform_indices = @transform_3, window_bounds = array<i64: 32, 72>}, {pipeline_mode = #tpu.pipeline_mode<synchronous>, transform_indices = @transform_4, window_bounds = array<i64: 32, 32>}, {pipeline_mode = #tpu.pipeline_mode<synchronous>, transform_indices = @transform_5, window_bounds = array<i64: 32, 1>}, {pipeline_mode = #tpu.pipeline_mode<synchronous>, transform_indices = @transform_6, window_bounds = array<i64: 8, 288>}, {pipeline_mode = #tpu.pipeline_mode<synchronous>, transform_indices = @transform_7, window_bounds = array<i64: 8, 1>}, {pipeline_mode = #tpu.pipeline_mode<synchronous>, transform_indices = @transform_8, window_bounds = array<i64: 16, 512>}]} {
    %c0 = arith.constant 0 : index
    %c0_0 = arith.constant 0 : index
    %0 = vector.load %arg1[%c0, %c0_0] : memref<8x512xf32, #tpu.memory_space<vmem>>, vector<8x512xf32>
    %c0_1 = arith.constant 0 : index
    %c0_2 = arith.constant 0 : index
    %1 = vector.load %arg2[%c0_1, %c0_2] : memref<8x512xf32, #tpu.memory_space<vmem>>, vector<8x512xf32>
    %c0_3 = arith.constant 0 : index
    %c0_4 = arith.constant 0 : index
    %2 = vector.load %arg3[%c0_3, %c0_4] : memref<16x8xf32, #tpu.memory_space<vmem>>, vector<16x8xf32>
    %cst = arith.constant dense<0.000000e+00> : vector<16x512xf32>
    %3 = tpu.matmul %2, %0, %cst {dimension_numbers = #tpu.dot_dimension_numbers<[1], [0], [0], [1], [0, 0, 1, 1], [], []>} : vector<16x8xf32>, vector<8x512xf32>, vector<16x512xf32> -> vector<16x512xf32>
    %4 = vector.extract_strided_slice %3 {offsets = [0, 0], sizes = [8, 512], strides = [1, 1]} : vector<16x512xf32> to vector<8x512xf32>
    %5 = vector.extract_strided_slice %3 {offsets = [8, 0], sizes = [8, 512], strides = [1, 1]} : vector<16x512xf32> to vector<8x512xf32>
    %c0_5 = arith.constant 0 : index
    %c0_6 = arith.constant 0 : index
    %6 = vector.load %arg4[%c0_5, %c0_6] : memref<32x72xf32, #tpu.memory_space<vmem>>, vector<32x72xf32>
    %c17_i32 = arith.constant 17 : i32
    %7 = tpu.dynamic_rotate %4 by %c17_i32 dim 1 : vector<8x512xf32>, i32 -> vector<8x512xf32>
    %8 = vector.extract_strided_slice %1 {offsets = [0, 0], sizes = [1, 512], strides = [1, 1]} : vector<8x512xf32> to vector<1x512xf32>
    %9 = vector.shape_cast %8 : vector<1x512xf32> to vector<512xf32>
    %10 = vector.shape_cast %9 : vector<512xf32> to vector<1x512xf32>
    %11 = vector.broadcast %10 : vector<1x512xf32> to vector<8x512xf32>
    %12 = arith.mulf %7, %11 : vector<8x512xf32>
    %c16_i32 = arith.constant 16 : i32
    %13 = tpu.dynamic_rotate %4 by %c16_i32 dim 1 : vector<8x512xf32>, i32 -> vector<8x512xf32>
    %14 = vector.extract_strided_slice %1 {offsets = [1, 0], sizes = [1, 512], strides = [1, 1]} : vector<8x512xf32> to vector<1x512xf32>
    %15 = vector.shape_cast %14 : vector<1x512xf32> to vector<512xf32>
    %16 = vector.shape_cast %15 : vector<512xf32> to vector<1x512xf32>
    %17 = vector.broadcast %16 : vector<1x512xf32> to vector<8x512xf32>
    %18 = arith.mulf %13, %17 : vector<8x512xf32>
    %c15_i32 = arith.constant 15 : i32
    %19 = tpu.dynamic_rotate %4 by %c15_i32 dim 1 : vector<8x512xf32>, i32 -> vector<8x512xf32>
    %20 = vector.extract_strided_slice %1 {offsets = [2, 0], sizes = [1, 512], strides = [1, 1]} : vector<8x512xf32> to vector<1x512xf32>
    %21 = vector.shape_cast %20 : vector<1x512xf32> to vector<512xf32>
    %22 = vector.shape_cast %21 : vector<512xf32> to vector<1x512xf32>
    %23 = vector.broadcast %22 : vector<1x512xf32> to vector<8x512xf32>
    %24 = arith.mulf %19, %23 : vector<8x512xf32>
    %c1_i32 = arith.constant 1 : i32
    %25 = tpu.dynamic_rotate %4 by %c1_i32 dim 1 : vector<8x512xf32>, i32 -> vector<8x512xf32>
    %26 = vector.extract_strided_slice %1 {offsets = [3, 0], sizes = [1, 512], strides = [1, 1]} : vector<8x512xf32> to vector<1x512xf32>
    %27 = vector.shape_cast %26 : vector<1x512xf32> to vector<512xf32>
    %28 = vector.shape_cast %27 : vector<512xf32> to vector<1x512xf32>
    %29 = vector.broadcast %28 : vector<1x512xf32> to vector<8x512xf32>
    %30 = arith.mulf %25, %29 : vector<8x512xf32>
    %c511_i32 = arith.constant 511 : i32
    %31 = tpu.dynamic_rotate %4 by %c511_i32 dim 1 : vector<8x512xf32>, i32 -> vector<8x512xf32>
    %32 = vector.extract_strided_slice %1 {offsets = [4, 0], sizes = [1, 512], strides = [1, 1]} : vector<8x512xf32> to vector<1x512xf32>
    %33 = vector.shape_cast %32 : vector<1x512xf32> to vector<512xf32>
    %34 = vector.shape_cast %33 : vector<512xf32> to vector<1x512xf32>
    %35 = vector.broadcast %34 : vector<1x512xf32> to vector<8x512xf32>
    %36 = arith.mulf %31, %35 : vector<8x512xf32>
    %c497_i32 = arith.constant 497 : i32
    %37 = tpu.dynamic_rotate %4 by %c497_i32 dim 1 : vector<8x512xf32>, i32 -> vector<8x512xf32>
    %38 = vector.extract_strided_slice %1 {offsets = [5, 0], sizes = [1, 512], strides = [1, 1]} : vector<8x512xf32> to vector<1x512xf32>
    %39 = vector.shape_cast %38 : vector<1x512xf32> to vector<512xf32>
    %40 = vector.shape_cast %39 : vector<512xf32> to vector<1x512xf32>
    %41 = vector.broadcast %40 : vector<1x512xf32> to vector<8x512xf32>
    %42 = arith.mulf %37, %41 : vector<8x512xf32>
    %c496_i32 = arith.constant 496 : i32
    %43 = tpu.dynamic_rotate %4 by %c496_i32 dim 1 : vector<8x512xf32>, i32 -> vector<8x512xf32>
    %44 = vector.extract_strided_slice %1 {offsets = [6, 0], sizes = [1, 512], strides = [1, 1]} : vector<8x512xf32> to vector<1x512xf32>
    %45 = vector.shape_cast %44 : vector<1x512xf32> to vector<512xf32>
    %46 = vector.shape_cast %45 : vector<512xf32> to vector<1x512xf32>
    %47 = vector.broadcast %46 : vector<1x512xf32> to vector<8x512xf32>
    %48 = arith.mulf %43, %47 : vector<8x512xf32>
    %c495_i32 = arith.constant 495 : i32
    %49 = tpu.dynamic_rotate %4 by %c495_i32 dim 1 : vector<8x512xf32>, i32 -> vector<8x512xf32>
    %50 = vector.extract_strided_slice %1 {offsets = [7, 0], sizes = [1, 512], strides = [1, 1]} : vector<8x512xf32> to vector<1x512xf32>
    %51 = vector.shape_cast %50 : vector<1x512xf32> to vector<512xf32>
    %52 = vector.shape_cast %51 : vector<512xf32> to vector<1x512xf32>
    %53 = vector.broadcast %52 : vector<1x512xf32> to vector<8x512xf32>
    %54 = arith.mulf %49, %53 : vector<8x512xf32>
    %55 = tpu.concatenate %12, %18, %24, %30, %4, %36, %42, %48, %54 in 0 : vector<8x512xf32>, vector<8x512xf32>, vector<8x512xf32>, vector<8x512xf32>, vector<8x512xf32>, vector<8x512xf32>, vector<8x512xf32>, vector<8x512xf32>, vector<8x512xf32> -> vector<72x512xf32>
    %cst_7 = arith.constant dense<0.000000e+00> : vector<32x512xf32>
    %56 = tpu.matmul %6, %55, %cst_7 {dimension_numbers = #tpu.dot_dimension_numbers<[1], [0], [0], [1], [0, 0, 1, 1], [], []>} : vector<32x72xf32>, vector<72x512xf32>, vector<32x512xf32> -> vector<32x512xf32>
    %cst_8 = arith.constant 0.000000e+00 : f32
    %57 = vector.broadcast %cst_8 : f32 to vector<32x512xf32>
    %58 = arith.maximumf %56, %57 : vector<32x512xf32>
    %c0_9 = arith.constant 0 : index
    %c0_10 = arith.constant 0 : index
    %59 = vector.load %arg5[%c0_9, %c0_10] : memref<32x32xf32, #tpu.memory_space<vmem>>, vector<32x32xf32>
    %cst_11 = arith.constant dense<0.000000e+00> : vector<32x512xf32>
    %60 = tpu.matmul %59, %58, %cst_11 {dimension_numbers = #tpu.dot_dimension_numbers<[1], [0], [0], [1], [0, 0, 1, 1], [], []>} : vector<32x32xf32>, vector<32x512xf32>, vector<32x512xf32> -> vector<32x512xf32>
    %c0_12 = arith.constant 0 : index
    %c0_13 = arith.constant 0 : index
    %61 = vector.load %arg6[%c0_12, %c0_13] : memref<32x1xf32, #tpu.memory_space<vmem>>, vector<32x1xf32>
    %62 = vector.broadcast %61 : vector<32x1xf32> to vector<32x512xf32>
    %63 = arith.addf %60, %62 : vector<32x512xf32>
    %cst_14 = arith.constant 0.000000e+00 : f32
    %64 = vector.broadcast %cst_14 : f32 to vector<32x512xf32>
    %65 = arith.maximumf %63, %64 : vector<32x512xf32>
    %c0_15 = arith.constant 0 : index
    %c0_16 = arith.constant 0 : index
    %66 = vector.load %arg7[%c0_15, %c0_16] : memref<8x288xf32, #tpu.memory_space<vmem>>, vector<8x288xf32>
    %c17_i32_17 = arith.constant 17 : i32
    %67 = tpu.dynamic_rotate %65 by %c17_i32_17 dim 1 : vector<32x512xf32>, i32 -> vector<32x512xf32>
    %68 = vector.extract_strided_slice %1 {offsets = [0, 0], sizes = [1, 512], strides = [1, 1]} : vector<8x512xf32> to vector<1x512xf32>
    %69 = vector.shape_cast %68 : vector<1x512xf32> to vector<512xf32>
    %70 = vector.shape_cast %69 : vector<512xf32> to vector<1x512xf32>
    %71 = vector.broadcast %70 : vector<1x512xf32> to vector<32x512xf32>
    %72 = arith.mulf %67, %71 : vector<32x512xf32>
    %c16_i32_18 = arith.constant 16 : i32
    %73 = tpu.dynamic_rotate %65 by %c16_i32_18 dim 1 : vector<32x512xf32>, i32 -> vector<32x512xf32>
    %74 = vector.extract_strided_slice %1 {offsets = [1, 0], sizes = [1, 512], strides = [1, 1]} : vector<8x512xf32> to vector<1x512xf32>
    %75 = vector.shape_cast %74 : vector<1x512xf32> to vector<512xf32>
    %76 = vector.shape_cast %75 : vector<512xf32> to vector<1x512xf32>
    %77 = vector.broadcast %76 : vector<1x512xf32> to vector<32x512xf32>
    %78 = arith.mulf %73, %77 : vector<32x512xf32>
    %c15_i32_19 = arith.constant 15 : i32
    %79 = tpu.dynamic_rotate %65 by %c15_i32_19 dim 1 : vector<32x512xf32>, i32 -> vector<32x512xf32>
    %80 = vector.extract_strided_slice %1 {offsets = [2, 0], sizes = [1, 512], strides = [1, 1]} : vector<8x512xf32> to vector<1x512xf32>
    %81 = vector.shape_cast %80 : vector<1x512xf32> to vector<512xf32>
    %82 = vector.shape_cast %81 : vector<512xf32> to vector<1x512xf32>
    %83 = vector.broadcast %82 : vector<1x512xf32> to vector<32x512xf32>
    %84 = arith.mulf %79, %83 : vector<32x512xf32>
    %c1_i32_20 = arith.constant 1 : i32
    %85 = tpu.dynamic_rotate %65 by %c1_i32_20 dim 1 : vector<32x512xf32>, i32 -> vector<32x512xf32>
    %86 = vector.extract_strided_slice %1 {offsets = [3, 0], sizes = [1, 512], strides = [1, 1]} : vector<8x512xf32> to vector<1x512xf32>
    %87 = vector.shape_cast %86 : vector<1x512xf32> to vector<512xf32>
    %88 = vector.shape_cast %87 : vector<512xf32> to vector<1x512xf32>
    %89 = vector.broadcast %88 : vector<1x512xf32> to vector<32x512xf32>
    %90 = arith.mulf %85, %89 : vector<32x512xf32>
    %c511_i32_21 = arith.constant 511 : i32
    %91 = tpu.dynamic_rotate %65 by %c511_i32_21 dim 1 : vector<32x512xf32>, i32 -> vector<32x512xf32>
    %92 = vector.extract_strided_slice %1 {offsets = [4, 0], sizes = [1, 512], strides = [1, 1]} : vector<8x512xf32> to vector<1x512xf32>
    %93 = vector.shape_cast %92 : vector<1x512xf32> to vector<512xf32>
    %94 = vector.shape_cast %93 : vector<512xf32> to vector<1x512xf32>
    %95 = vector.broadcast %94 : vector<1x512xf32> to vector<32x512xf32>
    %96 = arith.mulf %91, %95 : vector<32x512xf32>
    %c497_i32_22 = arith.constant 497 : i32
    %97 = tpu.dynamic_rotate %65 by %c497_i32_22 dim 1 : vector<32x512xf32>, i32 -> vector<32x512xf32>
    %98 = vector.extract_strided_slice %1 {offsets = [5, 0], sizes = [1, 512], strides = [1, 1]} : vector<8x512xf32> to vector<1x512xf32>
    %99 = vector.shape_cast %98 : vector<1x512xf32> to vector<512xf32>
    %100 = vector.shape_cast %99 : vector<512xf32> to vector<1x512xf32>
    %101 = vector.broadcast %100 : vector<1x512xf32> to vector<32x512xf32>
    %102 = arith.mulf %97, %101 : vector<32x512xf32>
    %c496_i32_23 = arith.constant 496 : i32
    %103 = tpu.dynamic_rotate %65 by %c496_i32_23 dim 1 : vector<32x512xf32>, i32 -> vector<32x512xf32>
    %104 = vector.extract_strided_slice %1 {offsets = [6, 0], sizes = [1, 512], strides = [1, 1]} : vector<8x512xf32> to vector<1x512xf32>
    %105 = vector.shape_cast %104 : vector<1x512xf32> to vector<512xf32>
    %106 = vector.shape_cast %105 : vector<512xf32> to vector<1x512xf32>
    %107 = vector.broadcast %106 : vector<1x512xf32> to vector<32x512xf32>
    %108 = arith.mulf %103, %107 : vector<32x512xf32>
    %c495_i32_24 = arith.constant 495 : i32
    %109 = tpu.dynamic_rotate %65 by %c495_i32_24 dim 1 : vector<32x512xf32>, i32 -> vector<32x512xf32>
    %110 = vector.extract_strided_slice %1 {offsets = [7, 0], sizes = [1, 512], strides = [1, 1]} : vector<8x512xf32> to vector<1x512xf32>
    %111 = vector.shape_cast %110 : vector<1x512xf32> to vector<512xf32>
    %112 = vector.shape_cast %111 : vector<512xf32> to vector<1x512xf32>
    %113 = vector.broadcast %112 : vector<1x512xf32> to vector<32x512xf32>
    %114 = arith.mulf %109, %113 : vector<32x512xf32>
    %115 = tpu.concatenate %72, %78, %84, %90, %65, %96, %102, %108, %114 in 0 : vector<32x512xf32>, vector<32x512xf32>, vector<32x512xf32>, vector<32x512xf32>, vector<32x512xf32>, vector<32x512xf32>, vector<32x512xf32>, vector<32x512xf32>, vector<32x512xf32> -> vector<288x512xf32>
    %cst_25 = arith.constant dense<0.000000e+00> : vector<8x512xf32>
    %116 = tpu.matmul %66, %115, %cst_25 {dimension_numbers = #tpu.dot_dimension_numbers<[1], [0], [0], [1], [0, 0, 1, 1], [], []>} : vector<8x288xf32>, vector<288x512xf32>, vector<8x512xf32> -> vector<8x512xf32>
    %c0_26 = arith.constant 0 : index
    %c0_27 = arith.constant 0 : index
    %117 = vector.load %arg8[%c0_26, %c0_27] : memref<8x1xf32, #tpu.memory_space<vmem>>, vector<8x1xf32>
    %118 = vector.broadcast %117 : vector<8x1xf32> to vector<8x512xf32>
    %119 = arith.addf %116, %118 : vector<8x512xf32>
    %120 = arith.addf %5, %119 : vector<8x512xf32>
    %121 = tpu.concatenate %4, %120 in 0 : vector<8x512xf32>, vector<8x512xf32> -> vector<16x512xf32>
    %c0_28 = arith.constant 0 : index
    %c0_29 = arith.constant 0 : index
    %122 = vector.load %arg9[%c0_28, %c0_29] : memref<16x512xf32, #tpu.memory_space<vmem>>, vector<16x512xf32>
    tpu.vector_store %arg9[%c0_28, %c0_29], %121 {strides = array<i32>} : memref<16x512xf32, #tpu.memory_space<vmem>>, vector<16x512xf32>,
    return
  }
  func.func @transform_0(%arg0: i32) -> (i32, i32) {
    %c0_i32 = arith.constant 0 : i32
    %c0_i32_0 = arith.constant 0 : i32
    %c0_i32_1 = arith.constant 0 : i32
    return %c0_i32, %c0_i32_0 : i32, i32
  }
  func.func @transform_1(%arg0: i32) -> (i32, i32) {
    %c0_i32 = arith.constant 0 : i32
    %c0_i32_0 = arith.constant 0 : i32
    %c0_i32_1 = arith.constant 0 : i32
    return %c0_i32, %c0_i32_0 : i32, i32
  }
  func.func @transform_2(%arg0: i32) -> (i32, i32) {
    %c0_i32 = arith.constant 0 : i32
    %c0_i32_0 = arith.constant 0 : i32
    %c0_i32_1 = arith.constant 0 : i32
    return %c0_i32, %c0_i32_0 : i32, i32
  }
  func.func @transform_3(%arg0: i32) -> (i32, i32) {
    %c0_i32 = arith.constant 0 : i32
    %c0_i32_0 = arith.constant 0 : i32
    %c0_i32_1 = arith.constant 0 : i32
    return %c0_i32, %c0_i32_0 : i32, i32
  }
  func.func @transform_4(%arg0: i32) -> (i32, i32) {
    %c0_i32 = arith.constant 0 : i32
    %c0_i32_0 = arith.constant 0 : i32
    %c0_i32_1 = arith.constant 0 : i32
    return %c0_i32, %c0_i32_0 : i32, i32
  }
  func.func @transform_5(%arg0: i32) -> (i32, i32) {
    %c0_i32 = arith.constant 0 : i32
    %c0_i32_0 = arith.constant 0 : i32
    %c0_i32_1 = arith.constant 0 : i32
    return %c0_i32, %c0_i32_0 : i32, i32
  }
  func.func @transform_6(%arg0: i32) -> (i32, i32) {
    %c0_i32 = arith.constant 0 : i32
    %c0_i32_0 = arith.constant 0 : i32
    %c0_i32_1 = arith.constant 0 : i32
    return %c0_i32, %c0_i32_0 : i32, i32
  }
  func.func @transform_7(%arg0: i32) -> (i32, i32) {
    %c0_i32 = arith.constant 0 : i32
    %c0_i32_0 = arith.constant 0 : i32
    %c0_i32_1 = arith.constant 0 : i32
    return %c0_i32, %c0_i32_0 : i32, i32
  }
  func.func @transform_8(%arg0: i32) -> (i32, i32) {
    %c0_i32 = arith.constant 0 : i32
    %c0_i32_0 = arith.constant 0 : i32
    %c0_i32_1 = arith.constant 0 : i32
    return %c0_i32, %c0_i32_0 : i32, i32
  }
}

</mosaic_0001>

<llo_original>
// kernel: tpu_custom_call.1
$region0: #{tpu_custom_call.1}
  #allocation0 [shape = 'u32[]', space=smem, size = 0x4, offset = 0x4, fixed_abs, tag = 'smem constant byte address 0x4 - core index']
  #allocation1 [shape = 'u32[72,128]{1,0:T(1,128)}', space=vmem, size = 0x9000, scoped, tag = 'internal scratch']
  %s0 = inlined_call_operand.vmem [shape: f32[8,512], index: 0, kind: input, shape index: {}]
  %s1 = inlined_call_operand.hbm [shape: f32[8,512], index: 1, kind: input, shape index: {}]
  %s2 = inlined_call_operand.vmem [shape: f32[16,8], index: 2, kind: input, shape index: {}]
  %s3 = inlined_call_operand.hbm [shape: f32[32,72], index: 3, kind: input, shape index: {}]
  %s4 = inlined_call_operand.hbm [shape: f32[32,32], index: 4, kind: input, shape index: {}]
  %s5 = inlined_call_operand.vmem [shape: f32[32,1], index: 5, kind: input, shape index: {}]
  %s6 = inlined_call_operand.vmem [shape: f32[8,288], index: 6, kind: input, shape index: {}]
  %s7 = inlined_call_operand.vmem [shape: f32[8,1], index: 7, kind: input, shape index: {}]
  %s8 = inlined_call_operand.hbm [shape: f32[16,512], index: 8, kind: output, shape index: {}]
  %s9 = sld [smem:[#allocation0]]
  $region54: #{tpu_custom_call.1} parent=0
    _
  %s11 = ssub.s32 1, %s9
  %s12 = scalar_select 0, %s11, %s9
  $region1: #{tpu_custom_call.1} parent=0
    #allocation2 [shape = 'u8[16384]{0}', space=vmem, size = 0x4000, scoped, tag = 'input window, operand 1, single buffered']
    #allocation3 [shape = 's32[1]{0}', space=sflag, size = 0x4, scoped, tag = 'scoped memory for tpu_custom_call.1']
    #allocation4 [shape = 's32[1]{0}', space=sflag, size = 0x4, scoped, tag = 'scoped memory for tpu_custom_call.1']
    #allocation5 [shape = 'u8[16384]{0}', space=vmem, size = 0x4000, scoped, tag = 'input window, operand 3, single buffered']
    #allocation6 [shape = 's32[1]{0}', space=sflag, size = 0x4, scoped, tag = 'scoped memory for tpu_custom_call.1']
    #allocation7 [shape = 'u8[16384]{0}', space=vmem, size = 0x4000, scoped, tag = 'input window, operand 4, single buffered']
    #allocation8 [shape = 'u8[32768]{0}', space=vmem, size = 0x8000, scoped, tag = 'output window, operand 0, single buffered']
    %13 = vsyncpa [#allocation3], 0
    %14 = vsyncpa [#allocation6], 0
    %15 = vsyncpa [#allocation4], 0
    // Predicated region
    $region2: #{tpu_custom_call.1} parent=1 // pred_check
      _
    $region3: #{tpu_custom_call.1} parent=1 // pred_check_branch
      %17 = sbr.rel (0) target = $region5
    $region4: #{tpu_custom_call.1} parent=1 // pred_region
      _
    $region5: #{tpu_custom_call.1} parent=1 // pred_fallthru
      _
    // Predicated region
    $region6: #{tpu_custom_call.1} parent=1 // pred_check
      _
    $region7: #{tpu_custom_call.1} parent=1 // pred_check_branch
      %19 = sbr.rel (0) target = $region9
    $region8: #{tpu_custom_call.1} parent=1 // pred_region
      %21 = vsyncadd [#allocation3], 0
      %s23 = sshll.u32 %s1, 4
      %s24 = int_to_ptr.hbm [resolvable:$true] %s23
      %s25 = sshll.u32 [#allocation2], 4
      %s26 = int_to_ptr.vmem [resolvable:$true] %s25
      %28 = dma.hbm_to_vmem [thread:$0]  %s24, 512, %s26, [#allocation3]
    $region9: #{tpu_custom_call.1} parent=1 // pred_fallthru
      _
    // Predicated region
    $region10: #{tpu_custom_call.1} parent=1 // pred_check
      _
    $region11: #{tpu_custom_call.1} parent=1 // pred_check_branch
      %30 = sbr.rel (0) target = $region13
    $region12: #{tpu_custom_call.1} parent=1 // pred_region
      _
    $region13: #{tpu_custom_call.1} parent=1 // pred_fallthru
      _
    // Predicated region
    $region14: #{tpu_custom_call.1} parent=1 // pred_check
      _
    $region15: #{tpu_custom_call.1} parent=1 // pred_check_branch
      %32 = sbr.rel (0) target = $region17
    $region16: #{tpu_custom_call.1} parent=1 // pred_region
      %34 = vsyncadd [#allocation6], 0
      %s35 = sshll.u32 %s3, 4
      %s36 = int_to_ptr.hbm [resolvable:$true] %s35
      %s37 = sshll.u32 [#allocation5], 4
      %s38 = int_to_ptr.vmem [resolvable:$true] %s37
      %43 = dma.hbm_to_vmem [thread:$0]  %s36, 512, %s38, [#allocation6], 128, 128, 8
    $region17: #{tpu_custom_call.1} parent=1 // pred_fallthru
      _
    // Predicated region
    $region18: #{tpu_custom_call.1} parent=1 // pred_check
      _
    $region19: #{tpu_custom_call.1} parent=1 // pred_check_branch
      %45 = sbr.rel (0) target = $region21
    $region20: #{tpu_custom_call.1} parent=1 // pred_region
      %47 = vsyncadd [#allocation6], 0
      %s48 = sshll.u32 %s4, 4
      %s49 = int_to_ptr.hbm [resolvable:$true] %s48
      %s50 = sshll.u32 [#allocation7], 4
      %s51 = int_to_ptr.vmem [resolvable:$true] %s50
      %56 = dma.hbm_to_vmem [thread:$0]  %s49, 512, %s51, [#allocation6], 128, 128, 8
    $region21: #{tpu_custom_call.1} parent=1 // pred_fallthru
      _
    // Predicated region
    $region22: #{tpu_custom_call.1} parent=1 // pred_check
      _
    $region23: #{tpu_custom_call.1} parent=1 // pred_check_branch
      %58 = sbr.rel (0) target = $region25
    $region24: #{tpu_custom_call.1} parent=1 // pred_region
      _
    $region25: #{tpu_custom_call.1} parent=1 // pred_fallthru
      _
    // Predicated region
    $region26: #{tpu_custom_call.1} parent=1 // pred_check
      _
    $region27: #{tpu_custom_call.1} parent=1 // pred_check_branch
      %60 = sbr.rel (0) target = $region29
    $region28: #{tpu_custom_call.1} parent=1 // pred_region
      _
    $region29: #{tpu_custom_call.1} parent=1 // pred_fallthru
      _
    // Predicated region
    $region30: #{tpu_custom_call.1} parent=1 // pred_check
      _
    $region31: #{tpu_custom_call.1} parent=1 // pred_check_branch
      %62 = sbr.rel (0) target = $region33
    $region32: #{tpu_custom_call.1} parent=1 // pred_region
      _
    $region33: #{tpu_custom_call.1} parent=1 // pred_fallthru
      _
    // Predicated region
    $region34: #{tpu_custom_call.1} parent=1 // pred_check
      _
    $region35: #{tpu_custom_call.1} parent=1 // pred_check_branch
      %64 = sbr.rel (0) target = $region37
    $region36: #{tpu_custom_call.1} parent=1 // pred_region
      %66 = dma.done [#allocation3], 512
    $region37: #{tpu_custom_call.1} parent=1 // pred_fallthru
      _
    // Predicated region
    $region38: #{tpu_custom_call.1} parent=1 // pred_check
      _
    $region39: #{tpu_custom_call.1} parent=1 // pred_check_branch
      %68 = sbr.rel (0) target = $region41
    $region40: #{tpu_custom_call.1} parent=1 // pred_region
      %70 = dma.done [#allocation6], 512
    $region41: #{tpu_custom_call.1} parent=1 // pred_fallthru
      _
    // Predicated region
    $region42: #{tpu_custom_call.1} parent=1 // pred_check
      _
    $region43: #{tpu_custom_call.1} parent=1 // pred_check_branch
      %72 = sbr.rel (0) target = $region45
    $region44: #{tpu_custom_call.1} parent=1 // pred_region
      %74 = dma.done [#allocation6], 512
    $region45: #{tpu_custom_call.1} parent=1 // pred_fallthru
      _
    %v75 = vld [vmem:[%s0] sm:$0xff]
    %v76 = vld [vmem:[%s0 + $0x8] sm:$0xff]
    %v77 = vld [vmem:[%s0 + $0x10] sm:$0xff]
    %v78 = vld [vmem:[%s0 + $0x18] sm:$0xff]
    %v79 = vld [vmem:[#allocation2] sm:$0xff]
    %v80 = vld [vmem:[#allocation2 + $0x8] sm:$0xff]
    %v81 = vld [vmem:[#allocation2 + $0x10] sm:$0xff]
    %v82 = vld [vmem:[#allocation2 + $0x18] sm:$0xff]
    %v83 = vld [vmem:[%s2] sm:$0xff]
    %v84 = vld [vmem:[%s2 + $0x8] sm:$0xff]
    %vm85 = vcmask 64512
    %v87 = vsel %vm85, %v83, 0
    %v90 = vsel %vm85, %v84, 0
    %92 = vmatpush.msra.mxu0 0.0
    %93 = vmatpush.msra.mxu0 0.0
    %94 = vmatpush.msra.mxu0 0.0
    %95 = vmatpush.msra.mxu0 0.0
    %96 = vmatpush.msra.mxu0 0.0
    %97 = vmatpush.msra.mxu0 0.0
    %98 = vmatpush.msra.mxu0 0.0
    %99 = vmatpush.msra.mxu0 0.0
    %100 = vmatpush.msra.mxu0 0.0
    %101 = vmatpush.msra.mxu0 0.0
    %102 = vmatpush.msra.mxu0 0.0
    %103 = vmatpush.msra.mxu0 0.0
    %104 = vmatpush.msra.mxu0 0.0
    %105 = vmatpush.msra.mxu0 0.0
    %106 = vmatpush.msra.mxu0 0.0
    %107 = vmatpush.msra.mxu0 %v75
    %108 = vmatmul.f32.gmra.mxu0 %v87
    %v109 = vpop.f32.mrf.mxu0
    %v110 = vadd.f32 0.0, %v109
    %111 = vmatmul.f32.gmra.mxu0 %v90
    %v112 = vpop.f32.mrf.mxu0
    %v113 = vadd.f32 0.0, %v112
    %114 = vdwg.mxu0
    %115 = vmatpush.msra.mxu0 0.0
    %116 = vmatpush.msra.mxu0 0.0
    %117 = vmatpush.msra.mxu0 0.0
    %118 = vmatpush.msra.mxu0 0.0
    %119 = vmatpush.msra.mxu0 0.0
    %120 = vmatpush.msra.mxu0 0.0
    %121 = vmatpush.msra.mxu0 0.0
    %122 = vmatpush.msra.mxu0 0.0
    %123 = vmatpush.msra.mxu0 0.0
    %124 = vmatpush.msra.mxu0 0.0
    %125 = vmatpush.msra.mxu0 0.0
    %126 = vmatpush.msra.mxu0 0.0
    %127 = vmatpush.msra.mxu0 0.0
    %128 = vmatpush.msra.mxu0 0.0
    %129 = vmatpush.msra.mxu0 0.0
    %130 = vmatpush.msra.mxu0 %v76
    %131 = vmatmul.f32.gmra.mxu0 %v87
    %v132 = vpop.f32.mrf.mxu0
    %v133 = vadd.f32 0.0, %v132
    %134 = vmatmul.f32.gmra.mxu0 %v90
    %v135 = vpop.f32.mrf.mxu0
    %v136 = vadd.f32 0.0, %v135
    %137 = vdwg.mxu0
    %138 = vmatpush.msra.mxu0 0.0
    %139 = vmatpush.msra.mxu0 0.0
    %140 = vmatpush.msra.mxu0 0.0
    %141 = vmatpush.msra.mxu0 0.0
    %142 = vmatpush.msra.mxu0 0.0
    %143 = vmatpush.msra.mxu0 0.0
    %144 = vmatpush.msra.mxu0 0.0
    %145 = vmatpush.msra.mxu0 0.0
    %146 = vmatpush.msra.mxu0 0.0
    %147 = vmatpush.msra.mxu0 0.0
    %148 = vmatpush.msra.mxu0 0.0
    %149 = vmatpush.msra.mxu0 0.0
    %150 = vmatpush.msra.mxu0 0.0
    %151 = vmatpush.msra.mxu0 0.0
    %152 = vmatpush.msra.mxu0 0.0
    %153 = vmatpush.msra.mxu0 %v77
    %154 = vmatmul.f32.gmra.mxu0 %v87
    %v155 = vpop.f32.mrf.mxu0
    %v156 = vadd.f32 0.0, %v155
    %157 = vmatmul.f32.gmra.mxu0 %v90
    %v158 = vpop.f32.mrf.mxu0
    %v159 = vadd.f32 0.0, %v158
    %160 = vdwg.mxu0
    %161 = vmatpush.msra.mxu0 0.0
    %162 = vmatpush.msra.mxu0 0.0
    %163 = vmatpush.msra.mxu0 0.0
    %164 = vmatpush.msra.mxu0 0.0
    %165 = vmatpush.msra.mxu0 0.0
    %166 = vmatpush.msra.mxu0 0.0
    %167 = vmatpush.msra.mxu0 0.0
    %168 = vmatpush.msra.mxu0 0.0
    %169 = vmatpush.msra.mxu0 0.0
    %170 = vmatpush.msra.mxu0 0.0
    %171 = vmatpush.msra.mxu0 0.0
    %172 = vmatpush.msra.mxu0 0.0
    %173 = vmatpush.msra.mxu0 0.0
    %174 = vmatpush.msra.mxu0 0.0
    %175 = vmatpush.msra.mxu0 0.0
    %176 = vmatpush.msra.mxu0 %v78
    %177 = vmatmul.f32.gmra.mxu0 %v87
    %v178 = vpop.f32.mrf.mxu0
    %v179 = vadd.f32 0.0, %v178
    %180 = vmatmul.f32.gmra.mxu0 %v90
    %v181 = vpop.f32.mrf.mxu0
    %v182 = vadd.f32 0.0, %v181
    %183 = vdwg.mxu0
    %v184 = vld [vmem:[#allocation5] sm:$0xff]
    %v185 = vld [vmem:[#allocation5 + $0x8] sm:$0xff]
    %v186 = vld [vmem:[#allocation5 + $0x10] sm:$0xff]
    %v187 = vld [vmem:[#allocation5 + $0x18] sm:$0xff]
    %188 = vrot.lane.b32.xlu0 %v110, 17
    %v189 = vpop.permute.xlu0 %188
    %190 = vrot.lane.b32.xlu0 %v133, 17
    %v191 = vpop.permute.xlu0 %190
    %192 = vrot.lane.b32.xlu0 %v156, 17
    %v193 = vpop.permute.xlu0 %192
    %194 = vrot.lane.b32.xlu0 %v179, 17
    %v195 = vpop.permute.xlu0 %194
    %v196 = vlaneseq
    %v197 = vand.u32 %v196, 127
    %vm198 = vcmp.lt.s32.totalorder %v197, 17
    %v199 = vsel %vm198, %v193, %v195
    %v200 = vsel %vm198, %v191, %v193
    %v201 = vsel %vm198, %v189, %v191
    %v202 = vsel %vm198, %v195, %v189
    %v203 = vperm.slane %v79, 0
    %v204 = vperm.slane %v80, 0
    %v205 = vperm.slane %v81, 0
    %v206 = vperm.slane %v82, 0
    %v207 = vmul.f32 %v202, %v203
    %v208 = vmul.f32 %v201, %v204
    %v209 = vmul.f32 %v200, %v205
    %v210 = vmul.f32 %v199, %v206
    %211 = vrot.lane.b32.xlu0 %v110, 16
    %v212 = vpop.permute.xlu0 %211
    %213 = vrot.lane.b32.xlu0 %v133, 16
    %v214 = vpop.permute.xlu0 %213
    %215 = vrot.lane.b32.xlu0 %v156, 16
    %v216 = vpop.permute.xlu0 %215
    %217 = vrot.lane.b32.xlu0 %v179, 16
    %v218 = vpop.permute.xlu0 %217
    %vm219 = vcmp.lt.s32.totalorder %v197, 16
    %v220 = vsel %vm219, %v216, %v218
    %v221 = vsel %vm219, %v214, %v216
    %v222 = vsel %vm219, %v212, %v214
    %v223 = vsel %vm219, %v218, %v212
    %v224 = vperm.slane %v79, 1
    %v225 = vperm.slane %v80, 1
    %v226 = vperm.slane %v81, 1
    %v227 = vperm.slane %v82, 1
    %v228 = vmul.f32 %v223, %v224
    %v229 = vmul.f32 %v222, %v225
    %v230 = vmul.f32 %v221, %v226
    %v231 = vmul.f32 %v220, %v227
    %232 = vrot.lane.b32.xlu0 %v110, 15
    %v233 = vpop.permute.xlu0 %232
    %234 = vrot.lane.b32.xlu0 %v133, 15
    %v235 = vpop.permute.xlu0 %234
    %236 = vrot.lane.b32.xlu0 %v156, 15
    %v237 = vpop.permute.xlu0 %236
    %238 = vrot.lane.b32.xlu0 %v179, 15
    %v239 = vpop.permute.xlu0 %238
    %vm240 = vcmp.lt.s32.totalorder %v197, 15
    %v241 = vsel %vm240, %v237, %v239
    %v242 = vsel %vm240, %v235, %v237
    %v243 = vsel %vm240, %v233, %v235
    %v244 = vsel %vm240, %v239, %v233
    %v245 = vperm.slane %v79, 2
    %v246 = vperm.slane %v80, 2
    %v247 = vperm.slane %v81, 2
    %v248 = vperm.slane %v82, 2
    %v249 = vmul.f32 %v244, %v245
    %v250 = vmul.f32 %v243, %v246
    %v251 = vmul.f32 %v242, %v247
    %v252 = vmul.f32 %v241, %v248
    %253 = vrot.lane.b32.xlu0 %v110, 1
    %v254 = vpop.permute.xlu0 %253
    %255 = vrot.lane.b32.xlu0 %v133, 1
    %v256 = vpop.permute.xlu0 %255
    %257 = vrot.lane.b32.xlu0 %v156, 1
    %v258 = vpop.permute.xlu0 %257
    %259 = vrot.lane.b32.xlu0 %v179, 1
    %v260 = vpop.permute.xlu0 %259
    %vm261 = vcmp.lt.s32.totalorder %v197, 1
    %v262 = vsel %vm261, %v258, %v260
    %v263 = vsel %vm261, %v256, %v258
    %v264 = vsel %vm261, %v254, %v256
    %v265 = vsel %vm261, %v260, %v254
    %v266 = vperm.slane %v79, 3
    %v267 = vperm.slane %v80, 3
    %v268 = vperm.slane %v81, 3
    %v269 = vperm.slane %v82, 3
    %v270 = vmul.f32 %v265, %v266
    %v271 = vmul.f32 %v264, %v267
    %v272 = vmul.f32 %v263, %v268
    %v273 = vmul.f32 %v262, %v269
    %274 = vrot.lane.b32.xlu0 %v110, 127
    %v275 = vpop.permute.xlu0 %274
    %276 = vrot.lane.b32.xlu0 %v133, 127
    %v277 = vpop.permute.xlu0 %276
    %278 = vrot.lane.b32.xlu0 %v156, 127
    %v279 = vpop.permute.xlu0 %278
    %280 = vrot.lane.b32.xlu0 %v179, 127
    %v281 = vpop.permute.xlu0 %280
    %vm282 = vcmp.lt.s32.totalorder %v197, 127
    %v283 = vsel %vm282, %v279, %v281
    %v284 = vsel %vm282, %v277, %v279
    %v285 = vsel %vm282, %v275, %v277
    %v286 = vsel %vm282, %v281, %v275
    %v287 = vperm.slane %v79, 4
    %v288 = vperm.slane %v80, 4
    %v289 = vperm.slane %v81, 4
    %v290 = vperm.slane %v82, 4
    %v291 = vmul.f32 %v285, %v287
    %v292 = vmul.f32 %v284, %v288
    %v293 = vmul.f32 %v283, %v289
    %v294 = vmul.f32 %v286, %v290
    %295 = vrot.lane.b32.xlu0 %v110, 113
    %v296 = vpop.permute.xlu0 %295
    %297 = vrot.lane.b32.xlu0 %v133, 113
    %v298 = vpop.permute.xlu0 %297
    %299 = vrot.lane.b32.xlu0 %v156, 113
    %v300 = vpop.permute.xlu0 %299
    %301 = vrot.lane.b32.xlu0 %v179, 113
    %v302 = vpop.permute.xlu0 %301
    %vm303 = vcmp.lt.s32.totalorder %v197, 113
    %v304 = vsel %vm303, %v300, %v302
    %v305 = vsel %vm303, %v298, %v300
    %v306 = vsel %vm303, %v296, %v298
    %v307 = vsel %vm303, %v302, %v296
    %v308 = vperm.slane %v79, 5
    %v309 = vperm.slane %v80, 5
    %v310 = vperm.slane %v81, 5
    %v311 = vperm.slane %v82, 5
    %v312 = vmul.f32 %v306, %v308
    %v313 = vmul.f32 %v305, %v309
    %v314 = vmul.f32 %v304, %v310
    %v315 = vmul.f32 %v307, %v311
    %316 = vrot.lane.b32.xlu0 %v110, 112
    %v317 = vpop.permute.xlu0 %316
    %318 = vrot.lane.b32.xlu0 %v133, 112
    %v319 = vpop.permute.xlu0 %318
    %320 = vrot.lane.b32.xlu0 %v156, 112
    %v321 = vpop.permute.xlu0 %320
    %322 = vrot.lane.b32.xlu0 %v179, 112
    %v323 = vpop.permute.xlu0 %322
    %vm324 = vcmp.lt.s32.totalorder %v197, 112
    %v325 = vsel %vm324, %v321, %v323
    %v326 = vsel %vm324, %v319, %v321
    %v327 = vsel %vm324, %v317, %v319
    %v328 = vsel %vm324, %v323, %v317
    %v329 = vperm.slane %v79, 6
    %v330 = vperm.slane %v80, 6
    %v331 = vperm.slane %v81, 6
    %v332 = vperm.slane %v82, 6
    %v333 = vmul.f32 %v327, %v329
    %v334 = vmul.f32 %v326, %v330
    %v335 = vmul.f32 %v325, %v331
    %v336 = vmul.f32 %v328, %v332
    %337 = vrot.lane.b32.xlu0 %v110, 111
    %v338 = vpop.permute.xlu0 %337
    %339 = vrot.lane.b32.xlu0 %v133, 111
    %v340 = vpop.permute.xlu0 %339
    %341 = vrot.lane.b32.xlu0 %v156, 111
    %v342 = vpop.permute.xlu0 %341
    %343 = vrot.lane.b32.xlu0 %v179, 111
    %v344 = vpop.permute.xlu0 %343
    %vm345 = vcmp.lt.s32.totalorder %v197, 111
    %v346 = vsel %vm345, %v342, %v344
    %v347 = vsel %vm345, %v340, %v342
    %v348 = vsel %vm345, %v338, %v340
    %v349 = vsel %vm345, %v344, %v338
    %v350 = vperm.slane %v79, 7
    %v351 = vperm.slane %v80, 7
    %v352 = vperm.slane %v81, 7
    %v353 = vperm.slane %v82, 7
    %v354 = vmul.f32 %v348, %v350
    %v355 = vmul.f32 %v347, %v351
    %v356 = vmul.f32 %v346, %v352
    %v357 = vmul.f32 %v349, %v353
    %vm358 = vcmask 588800
    %v360 = vsel %vm358, %v184, 0
    %v363 = vsel %vm358, %v185, 0
    %v366 = vsel %vm358, %v186, 0
    %v369 = vsel %vm358, %v187, 0
    %371 = vmatpush.msra.mxu0 0.0
    %372 = vmatpush.msra.mxu0 0.0
    %373 = vmatpush.msra.mxu0 0.0
    %374 = vmatpush.msra.mxu0 0.0
    %375 = vmatpush.msra.mxu0 0.0
    %376 = vmatpush.msra.mxu0 0.0
    %377 = vmatpush.msra.mxu0 0.0
    %378 = vmatpush.msra.mxu0 %v354
    %379 = vmatpush.msra.mxu0 %v333
    %380 = vmatpush.msra.mxu0 %v312
    %381 = vmatpush.msra.mxu0 %v291
    %382 = vmatpush.msra.mxu0 %v110
    %383 = vmatpush.msra.mxu0 %v270
    %384 = vmatpush.msra.mxu0 %v249
    %385 = vmatpush.msra.mxu0 %v228
    %386 = vmatpush.msra.mxu0 %v207
    %387 = vmatmul.f32.gmra.mxu0 %v360
    %v388 = vpop.f32.mrf.mxu0
    %v389 = vadd.f32 0.0, %v388
    %390 = vmatmul.f32.gmra.mxu0 %v363
    %v391 = vpop.f32.mrf.mxu0
    %v392 = vadd.f32 0.0, %v391
    %393 = vmatmul.f32.gmra.mxu0 %v366
    %v394 = vpop.f32.mrf.mxu0
    %v395 = vadd.f32 0.0, %v394
    %396 = vmatmul.f32.gmra.mxu0 %v369
    %v397 = vpop.f32.mrf.mxu0
    %v398 = vadd.f32 0.0, %v397
    %399 = vdwg.mxu0
    %400 = vmatpush.msra.mxu0 0.0
    %401 = vmatpush.msra.mxu0 0.0
    %402 = vmatpush.msra.mxu0 0.0
    %403 = vmatpush.msra.mxu0 0.0
    %404 = vmatpush.msra.mxu0 0.0
    %405 = vmatpush.msra.mxu0 0.0
    %406 = vmatpush.msra.mxu0 0.0
    %407 = vmatpush.msra.mxu0 %v355
    %408 = vmatpush.msra.mxu0 %v334
    %409 = vmatpush.msra.mxu0 %v313
    %410 = vmatpush.msra.mxu0 %v292
    %411 = vmatpush.msra.mxu0 %v133
    %412 = vmatpush.msra.mxu0 %v271
    %413 = vmatpush.msra.mxu0 %v250
    %414 = vmatpush.msra.mxu0 %v229
    %415 = vmatpush.msra.mxu0 %v208
    %416 = vmatmul.f32.gmra.mxu0 %v360
    %v417 = vpop.f32.mrf.mxu0
    %v418 = vadd.f32 0.0, %v417
    %419 = vmatmul.f32.gmra.mxu0 %v363
    %v420 = vpop.f32.mrf.mxu0
    %v421 = vadd.f32 0.0, %v420
    %422 = vmatmul.f32.gmra.mxu0 %v366
    %v423 = vpop.f32.mrf.mxu0
    %v424 = vadd.f32 0.0, %v423
    %425 = vmatmul.f32.gmra.mxu0 %v369
    %v426 = vpop.f32.mrf.mxu0
    %v427 = vadd.f32 0.0, %v426
    %428 = vdwg.mxu0
    %429 = vmatpush.msra.mxu0 0.0
    %430 = vmatpush.msra.mxu0 0.0
    %431 = vmatpush.msra.mxu0 0.0
    %432 = vmatpush.msra.mxu0 0.0
    %433 = vmatpush.msra.mxu0 0.0
    %434 = vmatpush.msra.mxu0 0.0
    %435 = vmatpush.msra.mxu0 0.0
    %436 = vmatpush.msra.mxu0 %v356
    %437 = vmatpush.msra.mxu0 %v335
    %438 = vmatpush.msra.mxu0 %v314
    %439 = vmatpush.msra.mxu0 %v293
    %440 = vmatpush.msra.mxu0 %v156
    %441 = vmatpush.msra.mxu0 %v272
    %442 = vmatpush.msra.mxu0 %v251
    %443 = vmatpush.msra.mxu0 %v230
    %444 = vmatpush.msra.mxu0 %v209
    %445 = vmatmul.f32.gmra.mxu0 %v360
    %v446 = vpop.f32.mrf.mxu0
    %v447 = vadd.f32 0.0, %v446
    %448 = vmatmul.f32.gmra.mxu0 %v363
    %v449 = vpop.f32.mrf.mxu0
    %v450 = vadd.f32 0.0, %v449
    %451 = vmatmul.f32.gmra.mxu0 %v366
    %v452 = vpop.f32.mrf.mxu0
    %v453 = vadd.f32 0.0, %v452
    %454 = vmatmul.f32.gmra.mxu0 %v369
    %v455 = vpop.f32.mrf.mxu0
    %v456 = vadd.f32 0.0, %v455
    %457 = vdwg.mxu0
    %458 = vmatpush.msra.mxu0 0.0
    %459 = vmatpush.msra.mxu0 0.0
    %460 = vmatpush.msra.mxu0 0.0
    %461 = vmatpush.msra.mxu0 0.0
    %462 = vmatpush.msra.mxu0 0.0
    %463 = vmatpush.msra.mxu0 0.0
    %464 = vmatpush.msra.mxu0 0.0
    %465 = vmatpush.msra.mxu0 %v357
    %466 = vmatpush.msra.mxu0 %v336
    %467 = vmatpush.msra.mxu0 %v315
    %468 = vmatpush.msra.mxu0 %v294
    %469 = vmatpush.msra.mxu0 %v179
    %470 = vmatpush.msra.mxu0 %v273
    %471 = vmatpush.msra.mxu0 %v252
    %472 = vmatpush.msra.mxu0 %v231
    %473 = vmatpush.msra.mxu0 %v210
    %474 = vmatmul.f32.gmra.mxu0 %v360
    %v475 = vpop.f32.mrf.mxu0
    %v476 = vadd.f32 0.0, %v475
    %477 = vmatmul.f32.gmra.mxu0 %v363
    %v478 = vpop.f32.mrf.mxu0
    %v479 = vadd.f32 0.0, %v478
    %480 = vmatmul.f32.gmra.mxu0 %v366
    %v481 = vpop.f32.mrf.mxu0
    %v482 = vadd.f32 0.0, %v481
    %483 = vmatmul.f32.gmra.mxu0 %v369
    %v484 = vpop.f32.mrf.mxu0
    %v485 = vadd.f32 0.0, %v484
    %486 = vdwg.mxu0
    %v487 = vmax.f32 %v389, 0.0
    %v488 = vmax.f32 %v418, 0.0
    %v489 = vmax.f32 %v447, 0.0
    %v490 = vmax.f32 %v476, 0.0
    %v491 = vmax.f32 %v392, 0.0
    %v492 = vmax.f32 %v421, 0.0
    %v493 = vmax.f32 %v450, 0.0
    %v494 = vmax.f32 %v479, 0.0
    %v495 = vmax.f32 %v395, 0.0
    %v496 = vmax.f32 %v424, 0.0
    %v497 = vmax.f32 %v453, 0.0
    %v498 = vmax.f32 %v482, 0.0
    %v499 = vmax.f32 %v398, 0.0
    %v500 = vmax.f32 %v427, 0.0
    %v501 = vmax.f32 %v456, 0.0
    %v502 = vmax.f32 %v485, 0.0
    %v503 = vld [vmem:[#allocation7] sm:$0xff]
    %v504 = vld [vmem:[#allocation7 + $0x8] sm:$0xff]
    %v505 = vld [vmem:[#allocation7 + $0x10] sm:$0xff]
    %v506 = vld [vmem:[#allocation7 + $0x18] sm:$0xff]
    %v507 = vld [vmem:[%s5] sm:$0xff]
    %v508 = vld [vmem:[%s5 + $0x8] sm:$0xff]
    %v509 = vld [vmem:[%s5 + $0x10] sm:$0xff]
    %v510 = vld [vmem:[%s5 + $0x18] sm:$0xff]
    %512 = vset.pattern.permute.xlu0 0
    %513 = vperm.xlu0 %512, %v507
    %v514 = vpop.permute.xlu0 %513
    %517 = vset.pattern.permute.xlu0 0
    %518 = vperm.xlu0 %517, %v508
    %v519 = vpop.permute.xlu0 %518
    %522 = vset.pattern.permute.xlu0 0
    %523 = vperm.xlu0 %522, %v509
    %v524 = vpop.permute.xlu0 %523
    %527 = vset.pattern.permute.xlu0 0
    %528 = vperm.xlu0 %527, %v510
    %v529 = vpop.permute.xlu0 %528
    %vm531 = vcmask 261120
    %v533 = vsel %vm531, %v503, 0
    %v536 = vsel %vm531, %v504, 0
    %v539 = vsel %vm531, %v505, 0
    %v542 = vsel %vm531, %v506, 0
    %544 = vmatpush.msra.mxu0 0.0
    %545 = vmatpush.msra.mxu0 0.0
    %546 = vmatpush.msra.mxu0 0.0
    %547 = vmatpush.msra.mxu0 0.0
    %548 = vmatpush.msra.mxu0 0.0
    %549 = vmatpush.msra.mxu0 0.0
    %550 = vmatpush.msra.mxu0 0.0
    %551 = vmatpush.msra.mxu0 0.0
    %552 = vmatpush.msra.mxu0 0.0
    %553 = vmatpush.msra.mxu0 0.0
    %554 = vmatpush.msra.mxu0 0.0
    %555 = vmatpush.msra.mxu0 0.0
    %556 = vmatpush.msra.mxu0 %v499
    %557 = vmatpush.msra.mxu0 %v495
    %558 = vmatpush.msra.mxu0 %v491
    %559 = vmatpush.msra.mxu0 %v487
    %560 = vmatmul.f32.gmra.mxu0 %v533
    %v561 = vpop.f32.mrf.mxu0
    %v562 = vadd.f32 %v514, %v561
    %563 = vmatmul.f32.gmra.mxu0 %v536
    %v564 = vpop.f32.mrf.mxu0
    %v565 = vadd.f32 %v519, %v564
    %566 = vmatmul.f32.gmra.mxu0 %v539
    %v567 = vpop.f32.mrf.mxu0
    %v568 = vadd.f32 %v524, %v567
    %569 = vmatmul.f32.gmra.mxu0 %v542
    %v570 = vpop.f32.mrf.mxu0
    %v571 = vadd.f32 %v529, %v570
    %572 = vdwg.mxu0
    %573 = vmatpush.msra.mxu0 0.0
    %574 = vmatpush.msra.mxu0 0.0
    %575 = vmatpush.msra.mxu0 0.0
    %576 = vmatpush.msra.mxu0 0.0
    %577 = vmatpush.msra.mxu0 0.0
    %578 = vmatpush.msra.mxu0 0.0
    %579 = vmatpush.msra.mxu0 0.0
    %580 = vmatpush.msra.mxu0 0.0
    %581 = vmatpush.msra.mxu0 0.0
    %582 = vmatpush.msra.mxu0 0.0
    %583 = vmatpush.msra.mxu0 0.0
    %584 = vmatpush.msra.mxu0 0.0
    %585 = vmatpush.msra.mxu0 %v500
    %586 = vmatpush.msra.mxu0 %v496
    %587 = vmatpush.msra.mxu0 %v492
    %588 = vmatpush.msra.mxu0 %v488
    %589 = vmatmul.f32.gmra.mxu0 %v533
    %v590 = vpop.f32.mrf.mxu0
    %v591 = vadd.f32 %v514, %v590
    %592 = vmatmul.f32.gmra.mxu0 %v536
    %v593 = vpop.f32.mrf.mxu0
    %v594 = vadd.f32 %v519, %v593
    %595 = vmatmul.f32.gmra.mxu0 %v539
    %v596 = vpop.f32.mrf.mxu0
    %v597 = vadd.f32 %v524, %v596
    %598 = vmatmul.f32.gmra.mxu0 %v542
    %v599 = vpop.f32.mrf.mxu0
    %v600 = vadd.f32 %v529, %v599
    %601 = vdwg.mxu0
    %602 = vmatpush.msra.mxu0 0.0
    %603 = vmatpush.msra.mxu0 0.0
    %604 = vmatpush.msra.mxu0 0.0
    %605 = vmatpush.msra.mxu0 0.0
    %606 = vmatpush.msra.mxu0 0.0
    %607 = vmatpush.msra.mxu0 0.0
    %608 = vmatpush.msra.mxu0 0.0
    %609 = vmatpush.msra.mxu0 0.0
    %610 = vmatpush.msra.mxu0 0.0
    %611 = vmatpush.msra.mxu0 0.0
    %612 = vmatpush.msra.mxu0 0.0
    %613 = vmatpush.msra.mxu0 0.0
    %614 = vmatpush.msra.mxu0 %v501
    %615 = vmatpush.msra.mxu0 %v497
    %616 = vmatpush.msra.mxu0 %v493
    %617 = vmatpush.msra.mxu0 %v489
    %618 = vmatmul.f32.gmra.mxu0 %v533
    %v619 = vpop.f32.mrf.mxu0
    %v620 = vadd.f32 %v514, %v619
    %621 = vmatmul.f32.gmra.mxu0 %v536
    %v622 = vpop.f32.mrf.mxu0
    %v623 = vadd.f32 %v519, %v622
    %624 = vmatmul.f32.gmra.mxu0 %v539
    %v625 = vpop.f32.mrf.mxu0
    %v626 = vadd.f32 %v524, %v625
    %627 = vmatmul.f32.gmra.mxu0 %v542
    %v628 = vpop.f32.mrf.mxu0
    %v629 = vadd.f32 %v529, %v628
    %630 = vdwg.mxu0
    %631 = vmatpush.msra.mxu0 0.0
    %632 = vmatpush.msra.mxu0 0.0
    %633 = vmatpush.msra.mxu0 0.0
    %634 = vmatpush.msra.mxu0 0.0
    %635 = vmatpush.msra.mxu0 0.0
    %636 = vmatpush.msra.mxu0 0.0
    %637 = vmatpush.msra.mxu0 0.0
    %638 = vmatpush.msra.mxu0 0.0
    %639 = vmatpush.msra.mxu0 0.0
    %640 = vmatpush.msra.mxu0 0.0
    %641 = vmatpush.msra.mxu0 0.0
    %642 = vmatpush.msra.mxu0 0.0
    %643 = vmatpush.msra.mxu0 %v502
    %644 = vmatpush.msra.mxu0 %v498
    %645 = vmatpush.msra.mxu0 %v494
    %646 = vmatpush.msra.mxu0 %v490
    %647 = vmatmul.f32.gmra.mxu0 %v533
    %v648 = vpop.f32.mrf.mxu0
    %v649 = vadd.f32 %v514, %v648
    %650 = vmatmul.f32.gmra.mxu0 %v536
    %v651 = vpop.f32.mrf.mxu0
    %v652 = vadd.f32 %v519, %v651
    %653 = vmatmul.f32.gmra.mxu0 %v539
    %v654 = vpop.f32.mrf.mxu0
    %v655 = vadd.f32 %v524, %v654
    %656 = vmatmul.f32.gmra.mxu0 %v542
    %v657 = vpop.f32.mrf.mxu0
    %v658 = vadd.f32 %v529, %v657
    %659 = vdwg.mxu0
    %v660 = vmax.f32 %v562, 0.0
    %v661 = vmax.f32 %v591, 0.0
    %v662 = vmax.f32 %v620, 0.0
    %v663 = vmax.f32 %v649, 0.0
    %v664 = vmax.f32 %v565, 0.0
    %v665 = vmax.f32 %v594, 0.0
    %v666 = vmax.f32 %v623, 0.0
    %v667 = vmax.f32 %v652, 0.0
    %v668 = vmax.f32 %v568, 0.0
    %v669 = vmax.f32 %v597, 0.0
    %v670 = vmax.f32 %v626, 0.0
    %v671 = vmax.f32 %v655, 0.0
    %v672 = vmax.f32 %v571, 0.0
    %v673 = vmax.f32 %v600, 0.0
    %v674 = vmax.f32 %v629, 0.0
    %v675 = vmax.f32 %v658, 0.0
    %v676 = vld [vmem:[%s6] sm:$0xff]
    %v677 = vld [vmem:[%s6 + $0x8] sm:$0xff]
    %v678 = vld [vmem:[%s6 + $0x10] sm:$0xff]
    %679 = vrot.lane.b32.xlu0 %v660, 17
    %v680 = vpop.permute.xlu0 %679
    %681 = vrot.lane.b32.xlu0 %v664, 17
    %v682 = vpop.permute.xlu0 %681
    %683 = vrot.lane.b32.xlu0 %v668, 17
    %v684 = vpop.permute.xlu0 %683
    %685 = vrot.lane.b32.xlu0 %v672, 17
    %v686 = vpop.permute.xlu0 %685
    %687 = vrot.lane.b32.xlu0 %v661, 17
    %v688 = vpop.permute.xlu0 %687
    %689 = vrot.lane.b32.xlu0 %v665, 17
    %v690 = vpop.permute.xlu0 %689
    %691 = vrot.lane.b32.xlu0 %v669, 17
    %v692 = vpop.permute.xlu0 %691
    %693 = vrot.lane.b32.xlu0 %v673, 17
    %v694 = vpop.permute.xlu0 %693
    %695 = vrot.lane.b32.xlu0 %v662, 17
    %v696 = vpop.permute.xlu0 %695
    %697 = vrot.lane.b32.xlu0 %v666, 17
    %v698 = vpop.permute.xlu0 %697
    %699 = vrot.lane.b32.xlu0 %v670, 17
    %v700 = vpop.permute.xlu0 %699
    %701 = vrot.lane.b32.xlu0 %v674, 17
    %v702 = vpop.permute.xlu0 %701
    %703 = vrot.lane.b32.xlu0 %v663, 17
    %v704 = vpop.permute.xlu0 %703
    %705 = vrot.lane.b32.xlu0 %v667, 17
    %v706 = vpop.permute.xlu0 %705
    %707 = vrot.lane.b32.xlu0 %v671, 17
    %v708 = vpop.permute.xlu0 %707
    %709 = vrot.lane.b32.xlu0 %v675, 17
    %v710 = vpop.permute.xlu0 %709
    %v711 = vsel %vm198, %v696, %v704
    %v712 = vsel %vm198, %v698, %v706
    %v713 = vsel %vm198, %v700, %v708
    %v714 = vsel %vm198, %v702, %v710
    %v715 = vsel %vm198, %v688, %v696
    %v716 = vsel %vm198, %v690, %v698
    %v717 = vsel %vm198, %v692, %v700
    %v718 = vsel %vm198, %v694, %v702
    %v719 = vsel %vm198, %v680, %v688
    %v720 = vsel %vm198, %v682, %v690
    %v721 = vsel %vm198, %v684, %v692
    %v722 = vsel %vm198, %v686, %v694
    %v723 = vsel %vm198, %v704, %v680
    %v724 = vsel %vm198, %v706, %v682
    %v725 = vsel %vm198, %v708, %v684
    %v726 = vsel %vm198, %v710, %v686
    %v727 = vmul.f32 %v723, %v203
    %v728 = vmul.f32 %v719, %v204
    %v729 = vmul.f32 %v715, %v205
    %v730 = vmul.f32 %v711, %v206
    %v731 = vmul.f32 %v724, %v203
    %v732 = vmul.f32 %v720, %v204
    %v733 = vmul.f32 %v716, %v205
    %v734 = vmul.f32 %v712, %v206
    %v735 = vmul.f32 %v725, %v203
    %v736 = vmul.f32 %v721, %v204
    %v737 = vmul.f32 %v717, %v205
    %v738 = vmul.f32 %v713, %v206
    %v739 = vmul.f32 %v726, %v203
    %v740 = vmul.f32 %v722, %v204
    %v741 = vmul.f32 %v718, %v205
    %v742 = vmul.f32 %v714, %v206
    %743 = vrot.lane.b32.xlu0 %v660, 16
    %v744 = vpop.permute.xlu0 %743
    %745 = vrot.lane.b32.xlu0 %v664, 16
    %v746 = vpop.permute.xlu0 %745
    %747 = vrot.lane.b32.xlu0 %v668, 16
    %v748 = vpop.permute.xlu0 %747
    %749 = vrot.lane.b32.xlu0 %v672, 16
    %v750 = vpop.permute.xlu0 %749
    %751 = vrot.lane.b32.xlu0 %v661, 16
    %v752 = vpop.permute.xlu0 %751
    %753 = vrot.lane.b32.xlu0 %v665, 16
    %v754 = vpop.permute.xlu0 %753
    %755 = vrot.lane.b32.xlu0 %v669, 16
    %v756 = vpop.permute.xlu0 %755
    %757 = vrot.lane.b32.xlu0 %v673, 16
    %v758 = vpop.permute.xlu0 %757
    %759 = vrot.lane.b32.xlu0 %v662, 16
    %v760 = vpop.permute.xlu0 %759
    %761 = vrot.lane.b32.xlu0 %v666, 16
    %v762 = vpop.permute.xlu0 %761
    %763 = vrot.lane.b32.xlu0 %v670, 16
    %v764 = vpop.permute.xlu0 %763
    %765 = vrot.lane.b32.xlu0 %v674, 16
    %v766 = vpop.permute.xlu0 %765
    %767 = vrot.lane.b32.xlu0 %v663, 16
    %v768 = vpop.permute.xlu0 %767
    %769 = vrot.lane.b32.xlu0 %v667, 16
    %v770 = vpop.permute.xlu0 %769
    %771 = vrot.lane.b32.xlu0 %v671, 16
    %v772 = vpop.permute.xlu0 %771
    %773 = vrot.lane.b32.xlu0 %v675, 16
    %v774 = vpop.permute.xlu0 %773
    %v775 = vsel %vm219, %v760, %v768
    %v776 = vsel %vm219, %v762, %v770
    %v777 = vsel %vm219, %v764, %v772
    %v778 = vsel %vm219, %v766, %v774
    %v779 = vsel %vm219, %v752, %v760
    %v780 = vsel %vm219, %v754, %v762
    %v781 = vsel %vm219, %v756, %v764
    %v782 = vsel %vm219, %v758, %v766
    %v783 = vsel %vm219, %v744, %v752
    %v784 = vsel %vm219, %v746, %v754
    %v785 = vsel %vm219, %v748, %v756
    %v786 = vsel %vm219, %v750, %v758
    %v787 = vsel %vm219, %v768, %v744
    %v788 = vsel %vm219, %v770, %v746
    %v789 = vsel %vm219, %v772, %v748
    %v790 = vsel %vm219, %v774, %v750
    %v791 = vmul.f32 %v787, %v224
    %v792 = vmul.f32 %v783, %v225
    %v793 = vmul.f32 %v779, %v226
    %v794 = vmul.f32 %v775, %v227
    %v795 = vmul.f32 %v788, %v224
    %v796 = vmul.f32 %v784, %v225
    %v797 = vmul.f32 %v780, %v226
    %v798 = vmul.f32 %v776, %v227
    %v799 = vmul.f32 %v789, %v224
    %v800 = vmul.f32 %v785, %v225
    %v801 = vmul.f32 %v781, %v226
    %v802 = vmul.f32 %v777, %v227
    %v803 = vmul.f32 %v790, %v224
    %v804 = vmul.f32 %v786, %v225
    %v805 = vmul.f32 %v782, %v226
    %v806 = vmul.f32 %v778, %v227
    %807 = vrot.lane.b32.xlu0 %v660, 15
    %v808 = vpop.permute.xlu0 %807
    %809 = vrot.lane.b32.xlu0 %v664, 15
    %v810 = vpop.permute.xlu0 %809
    %811 = vrot.lane.b32.xlu0 %v668, 15
    %v812 = vpop.permute.xlu0 %811
    %813 = vrot.lane.b32.xlu0 %v672, 15
    %v814 = vpop.permute.xlu0 %813
    %815 = vrot.lane.b32.xlu0 %v661, 15
    %v816 = vpop.permute.xlu0 %815
    %817 = vrot.lane.b32.xlu0 %v665, 15
    %v818 = vpop.permute.xlu0 %817
    %819 = vrot.lane.b32.xlu0 %v669, 15
    %v820 = vpop.permute.xlu0 %819
    %821 = vrot.lane.b32.xlu0 %v673, 15
    %v822 = vpop.permute.xlu0 %821
    %823 = vrot.lane.b32.xlu0 %v662, 15
    %v824 = vpop.permute.xlu0 %823
    %825 = vrot.lane.b32.xlu0 %v666, 15
    %v826 = vpop.permute.xlu0 %825
    %827 = vrot.lane.b32.xlu0 %v670, 15
    %v828 = vpop.permute.xlu0 %827
    %829 = vrot.lane.b32.xlu0 %v674, 15
    %v830 = vpop.permute.xlu0 %829
    %831 = vrot.lane.b32.xlu0 %v663, 15
    %v832 = vpop.permute.xlu0 %831
    %833 = vrot.lane.b32.xlu0 %v667, 15
    %v834 = vpop.permute.xlu0 %833
    %835 = vrot.lane.b32.xlu0 %v671, 15
    %v836 = vpop.permute.xlu0 %835
    %837 = vrot.lane.b32.xlu0 %v675, 15
    %v838 = vpop.permute.xlu0 %837
    %v839 = vsel %vm240, %v824, %v832
    %v840 = vsel %vm240, %v826, %v834
    %v841 = vsel %vm240, %v828, %v836
    %v842 = vsel %vm240, %v830, %v838
    %v843 = vsel %vm240, %v816, %v824
    %v844 = vsel %vm240, %v818, %v826
    %v845 = vsel %vm240, %v820, %v828
    %v846 = vsel %vm240, %v822, %v830
    %v847 = vsel %vm240, %v808, %v816
    %v848 = vsel %vm240, %v810, %v818
    %v849 = vsel %vm240, %v812, %v820
    %v850 = vsel %vm240, %v814, %v822
    %v851 = vsel %vm240, %v832, %v808
    %v852 = vsel %vm240, %v834, %v810
    %v853 = vsel %vm240, %v836, %v812
    %v854 = vsel %vm240, %v838, %v814
    %v855 = vmul.f32 %v851, %v245
    %v856 = vmul.f32 %v847, %v246
    %v857 = vmul.f32 %v843, %v247
    %v858 = vmul.f32 %v839, %v248
    %v859 = vmul.f32 %v852, %v245
    %v860 = vmul.f32 %v848, %v246
    %v861 = vmul.f32 %v844, %v247
    %v862 = vmul.f32 %v840, %v248
    %v863 = vmul.f32 %v853, %v245
    %v864 = vmul.f32 %v849, %v246
    %v865 = vmul.f32 %v845, %v247
    %v866 = vmul.f32 %v841, %v248
    %v867 = vmul.f32 %v854, %v245
    %v868 = vmul.f32 %v850, %v246
    %v869 = vmul.f32 %v846, %v247
    %v870 = vmul.f32 %v842, %v248
    %871 = vrot.lane.b32.xlu0 %v660, 1
    %v872 = vpop.permute.xlu0 %871
    %873 = vrot.lane.b32.xlu0 %v664, 1
    %v874 = vpop.permute.xlu0 %873
    %875 = vrot.lane.b32.xlu0 %v668, 1
    %v876 = vpop.permute.xlu0 %875
    %877 = vrot.lane.b32.xlu0 %v672, 1
    %v878 = vpop.permute.xlu0 %877
    %879 = vrot.lane.b32.xlu0 %v661, 1
    %v880 = vpop.permute.xlu0 %879
    %881 = vrot.lane.b32.xlu0 %v665, 1
    %v882 = vpop.permute.xlu0 %881
    %883 = vrot.lane.b32.xlu0 %v669, 1
    %v884 = vpop.permute.xlu0 %883
    %885 = vrot.lane.b32.xlu0 %v673, 1
    %v886 = vpop.permute.xlu0 %885
    %887 = vrot.lane.b32.xlu0 %v662, 1
    %v888 = vpop.permute.xlu0 %887
    %889 = vrot.lane.b32.xlu0 %v666, 1
    %v890 = vpop.permute.xlu0 %889
    %891 = vrot.lane.b32.xlu0 %v670, 1
    %v892 = vpop.permute.xlu0 %891
    %893 = vrot.lane.b32.xlu0 %v674, 1
    %v894 = vpop.permute.xlu0 %893
    %895 = vrot.lane.b32.xlu0 %v663, 1
    %v896 = vpop.permute.xlu0 %895
    %897 = vrot.lane.b32.xlu0 %v667, 1
    %v898 = vpop.permute.xlu0 %897
    %899 = vrot.lane.b32.xlu0 %v671, 1
    %v900 = vpop.permute.xlu0 %899
    %901 = vrot.lane.b32.xlu0 %v675, 1
    %v902 = vpop.permute.xlu0 %901
    %v903 = vsel %vm261, %v888, %v896
    %v904 = vsel %vm261, %v890, %v898
    %v905 = vsel %vm261, %v892, %v900
    %v906 = vsel %vm261, %v894, %v902
    %v907 = vsel %vm261, %v880, %v888
    %v908 = vsel %vm261, %v882, %v890
    %v909 = vsel %vm261, %v884, %v892
    %v910 = vsel %vm261, %v886, %v894
    %v911 = vsel %vm261, %v872, %v880
    %v912 = vsel %vm261, %v874, %v882
    %v913 = vsel %vm261, %v876, %v884
    %v914 = vsel %vm261, %v878, %v886
    %v915 = vsel %vm261, %v896, %v872
    %v916 = vsel %vm261, %v898, %v874
    %v917 = vsel %vm261, %v900, %v876
    %v918 = vsel %vm261, %v902, %v878
    %v919 = vmul.f32 %v915, %v266
    %v920 = vmul.f32 %v911, %v267
    %v921 = vmul.f32 %v907, %v268
    %v922 = vmul.f32 %v903, %v269
    %v923 = vmul.f32 %v916, %v266
    %v924 = vmul.f32 %v912, %v267
    %v925 = vmul.f32 %v908, %v268
    %v926 = vmul.f32 %v904, %v269
    %v927 = vmul.f32 %v917, %v266
    %v928 = vmul.f32 %v913, %v267
    %v929 = vmul.f32 %v909, %v268
    %v930 = vmul.f32 %v905, %v269
    %v931 = vmul.f32 %v918, %v266
    %v932 = vmul.f32 %v914, %v267
    %v933 = vmul.f32 %v910, %v268
    %v934 = vmul.f32 %v906, %v269
    %935 = vrot.lane.b32.xlu0 %v660, 127
    %v936 = vpop.permute.xlu0 %935
    %937 = vrot.lane.b32.xlu0 %v664, 127
    %v938 = vpop.permute.xlu0 %937
    %939 = vrot.lane.b32.xlu0 %v668, 127
    %v940 = vpop.permute.xlu0 %939
    %941 = vrot.lane.b32.xlu0 %v672, 127
    %v942 = vpop.permute.xlu0 %941
    %943 = vrot.lane.b32.xlu0 %v661, 127
    %v944 = vpop.permute.xlu0 %943
    %945 = vrot.lane.b32.xlu0 %v665, 127
    %v946 = vpop.permute.xlu0 %945
    %947 = vrot.lane.b32.xlu0 %v669, 127
    %v948 = vpop.permute.xlu0 %947
    %949 = vrot.lane.b32.xlu0 %v673, 127
    %v950 = vpop.permute.xlu0 %949
    %951 = vrot.lane.b32.xlu0 %v662, 127
    %v952 = vpop.permute.xlu0 %951
    %953 = vrot.lane.b32.xlu0 %v666, 127
    %v954 = vpop.permute.xlu0 %953
    %955 = vrot.lane.b32.xlu0 %v670, 127
    %v956 = vpop.permute.xlu0 %955
    %957 = vrot.lane.b32.xlu0 %v674, 127
    %v958 = vpop.permute.xlu0 %957
    %959 = vrot.lane.b32.xlu0 %v663, 127
    %v960 = vpop.permute.xlu0 %959
    %961 = vrot.lane.b32.xlu0 %v667, 127
    %v962 = vpop.permute.xlu0 %961
    %963 = vrot.lane.b32.xlu0 %v671, 127
    %v964 = vpop.permute.xlu0 %963
    %965 = vrot.lane.b32.xlu0 %v675, 127
    %v966 = vpop.permute.xlu0 %965
    %v967 = vsel %vm282, %v952, %v960
    %v968 = vsel %vm282, %v954, %v962
    %v969 = vsel %vm282, %v956, %v964
    %v970 = vsel %vm282, %v958, %v966
    %v971 = vsel %vm282, %v944, %v952
    %v972 = vsel %vm282, %v946, %v954
    %v973 = vsel %vm282, %v948, %v956
    %v974 = vsel %vm282, %v950, %v958
    %v975 = vsel %vm282, %v936, %v944
    %v976 = vsel %vm282, %v938, %v946
    %v977 = vsel %vm282, %v940, %v948
    %v978 = vsel %vm282, %v942, %v950
    %v979 = vsel %vm282, %v960, %v936
    %v980 = vsel %vm282, %v962, %v938
    %v981 = vsel %vm282, %v964, %v940
    %v982 = vsel %vm282, %v966, %v942
    %v983 = vmul.f32 %v975, %v287
    %v984 = vmul.f32 %v971, %v288
    %v985 = vmul.f32 %v967, %v289
    %v986 = vmul.f32 %v979, %v290
    %v987 = vmul.f32 %v976, %v287
    %v988 = vmul.f32 %v972, %v288
    %v989 = vmul.f32 %v968, %v289
    %v990 = vmul.f32 %v980, %v290
    %v991 = vmul.f32 %v977, %v287
    %v992 = vmul.f32 %v973, %v288
    %v993 = vmul.f32 %v969, %v289
    %v994 = vmul.f32 %v981, %v290
    %v995 = vmul.f32 %v978, %v287
    %v996 = vmul.f32 %v974, %v288
    %v997 = vmul.f32 %v970, %v289
    %v998 = vmul.f32 %v982, %v290
    %999 = vrot.lane.b32.xlu0 %v660, 113
    %v1000 = vpop.permute.xlu0 %999
    %1001 = vrot.lane.b32.xlu0 %v664, 113
    %v1002 = vpop.permute.xlu0 %1001
    %1003 = vrot.lane.b32.xlu0 %v668, 113
    %v1004 = vpop.permute.xlu0 %1003
    %1005 = vrot.lane.b32.xlu0 %v672, 113
    %v1006 = vpop.permute.xlu0 %1005
    %1007 = vrot.lane.b32.xlu0 %v661, 113
    %v1008 = vpop.permute.xlu0 %1007
    %1009 = vrot.lane.b32.xlu0 %v665, 113
    %v1010 = vpop.permute.xlu0 %1009
    %1011 = vrot.lane.b32.xlu0 %v669, 113
    %v1012 = vpop.permute.xlu0 %1011
    %1013 = vrot.lane.b32.xlu0 %v673, 113
    %v1014 = vpop.permute.xlu0 %1013
    %1015 = vrot.lane.b32.xlu0 %v662, 113
    %v1016 = vpop.permute.xlu0 %1015
    %1017 = vrot.lane.b32.xlu0 %v666, 113
    %v1018 = vpop.permute.xlu0 %1017
    %1019 = vrot.lane.b32.xlu0 %v670, 113
    %v1020 = vpop.permute.xlu0 %1019
    %1021 = vrot.lane.b32.xlu0 %v674, 113
    %v1022 = vpop.permute.xlu0 %1021
    %1023 = vrot.lane.b32.xlu0 %v663, 113
    %v1024 = vpop.permute.xlu0 %1023
    %1025 = vrot.lane.b32.xlu0 %v667, 113
    %v1026 = vpop.permute.xlu0 %1025
    %1027 = vrot.lane.b32.xlu0 %v671, 113
    %v1028 = vpop.permute.xlu0 %1027
    %1029 = vrot.lane.b32.xlu0 %v675, 113
    %v1030 = vpop.permute.xlu0 %1029
    %v1031 = vsel %vm303, %v1016, %v1024
    %v1032 = vsel %vm303, %v1018, %v1026
    %v1033 = vsel %vm303, %v1020, %v1028
    %v1034 = vsel %vm303, %v1022, %v1030
    %v1035 = vsel %vm303, %v1008, %v1016
    %v1036 = vsel %vm303, %v1010, %v1018
    %v1037 = vsel %vm303, %v1012, %v1020
    %v1038 = vsel %vm303, %v1014, %v1022
    %v1039 = vsel %vm303, %v1000, %v1008
    %v1040 = vsel %vm303, %v1002, %v1010
    %v1041 = vsel %vm303, %v1004, %v1012
    %v1042 = vsel %vm303, %v1006, %v1014
    %v1043 = vsel %vm303, %v1024, %v1000
    %v1044 = vsel %vm303, %v1026, %v1002
    %v1045 = vsel %vm303, %v1028, %v1004
    %v1046 = vsel %vm303, %v1030, %v1006
    %v1047 = vmul.f32 %v1039, %v308
    %v1048 = vmul.f32 %v1035, %v309
    %v1049 = vmul.f32 %v1031, %v310
    %v1050 = vmul.f32 %v1043, %v311
    %v1051 = vmul.f32 %v1040, %v308
    %v1052 = vmul.f32 %v1036, %v309
    %v1053 = vmul.f32 %v1032, %v310
    %v1054 = vmul.f32 %v1044, %v311
    %v1055 = vmul.f32 %v1041, %v308
    %v1056 = vmul.f32 %v1037, %v309
    %v1057 = vmul.f32 %v1033, %v310
    %v1058 = vmul.f32 %v1045, %v311
    %v1059 = vmul.f32 %v1042, %v308
    %v1060 = vmul.f32 %v1038, %v309
    %v1061 = vmul.f32 %v1034, %v310
    %v1062 = vmul.f32 %v1046, %v311
    %1063 = vrot.lane.b32.xlu0 %v660, 112
    %v1064 = vpop.permute.xlu0 %1063
    %1065 = vrot.lane.b32.xlu0 %v664, 112
    %v1066 = vpop.permute.xlu0 %1065
    %1067 = vrot.lane.b32.xlu0 %v668, 112
    %v1068 = vpop.permute.xlu0 %1067
    %1069 = vrot.lane.b32.xlu0 %v672, 112
    %v1070 = vpop.permute.xlu0 %1069
    %1071 = vrot.lane.b32.xlu0 %v661, 112
    %v1072 = vpop.permute.xlu0 %1071
    %1073 = vrot.lane.b32.xlu0 %v665, 112
    %v1074 = vpop.permute.xlu0 %1073
    %1075 = vrot.lane.b32.xlu0 %v669, 112
    %v1076 = vpop.permute.xlu0 %1075
    %1077 = vrot.lane.b32.xlu0 %v673, 112
    %v1078 = vpop.permute.xlu0 %1077
    %1079 = vrot.lane.b32.xlu0 %v662, 112
    %v1080 = vpop.permute.xlu0 %1079
    %1081 = vrot.lane.b32.xlu0 %v666, 112
    %v1082 = vpop.permute.xlu0 %1081
    %1083 = vrot.lane.b32.xlu0 %v670, 112
    %v1084 = vpop.permute.xlu0 %1083
    %1085 = vrot.lane.b32.xlu0 %v674, 112
    %v1086 = vpop.permute.xlu0 %1085
    %1087 = vrot.lane.b32.xlu0 %v663, 112
    %v1088 = vpop.permute.xlu0 %1087
    %1089 = vrot.lane.b32.xlu0 %v667, 112
    %v1090 = vpop.permute.xlu0 %1089
    %1091 = vrot.lane.b32.xlu0 %v671, 112
    %v1092 = vpop.permute.xlu0 %1091
    %1093 = vrot.lane.b32.xlu0 %v675, 112
    %v1094 = vpop.permute.xlu0 %1093
    %v1095 = vsel %vm324, %v1080, %v1088
    %v1096 = vsel %vm324, %v1082, %v1090
    %v1097 = vsel %vm324, %v1084, %v1092
    %v1098 = vsel %vm324, %v1086, %v1094
    %v1099 = vsel %vm324, %v1072, %v1080
    %v1100 = vsel %vm324, %v1074, %v1082
    %v1101 = vsel %vm324, %v1076, %v1084
    %v1102 = vsel %vm324, %v1078, %v1086
    %v1103 = vsel %vm324, %v1064, %v1072
    %v1104 = vsel %vm324, %v1066, %v1074
    %v1105 = vsel %vm324, %v1068, %v1076
    %v1106 = vsel %vm324, %v1070, %v1078
    %v1107 = vsel %vm324, %v1088, %v1064
    %v1108 = vsel %vm324, %v1090, %v1066
    %v1109 = vsel %vm324, %v1092, %v1068
    %v1110 = vsel %vm324, %v1094, %v1070
    %v1111 = vmul.f32 %v1103, %v329
    %v1112 = vmul.f32 %v1099, %v330
    %v1113 = vmul.f32 %v1095, %v331
    %v1114 = vmul.f32 %v1107, %v332
    %v1115 = vmul.f32 %v1104, %v329
    %v1116 = vmul.f32 %v1100, %v330
    %v1117 = vmul.f32 %v1096, %v331
    %v1118 = vmul.f32 %v1108, %v332
    %v1119 = vmul.f32 %v1105, %v329
    %v1120 = vmul.f32 %v1101, %v330
    %v1121 = vmul.f32 %v1097, %v331
    %v1122 = vmul.f32 %v1109, %v332
    %v1123 = vmul.f32 %v1106, %v329
    %v1124 = vmul.f32 %v1102, %v330
    %v1125 = vmul.f32 %v1098, %v331
    %v1126 = vmul.f32 %v1110, %v332
    %1127 = vrot.lane.b32.xlu0 %v660, 111
    %v1128 = vpop.permute.xlu0 %1127
    %1129 = vrot.lane.b32.xlu0 %v664, 111
    %v1130 = vpop.permute.xlu0 %1129
    %1131 = vrot.lane.b32.xlu0 %v668, 111
    %v1132 = vpop.permute.xlu0 %1131
    %1133 = vrot.lane.b32.xlu0 %v672, 111
    %v1134 = vpop.permute.xlu0 %1133
    %1135 = vrot.lane.b32.xlu0 %v661, 111
    %v1136 = vpop.permute.xlu0 %1135
    %1137 = vrot.lane.b32.xlu0 %v665, 111
    %v1138 = vpop.permute.xlu0 %1137
    %1139 = vrot.lane.b32.xlu0 %v669, 111
    %v1140 = vpop.permute.xlu0 %1139
    %1141 = vrot.lane.b32.xlu0 %v673, 111
    %v1142 = vpop.permute.xlu0 %1141
    %1143 = vrot.lane.b32.xlu0 %v662, 111
    %v1144 = vpop.permute.xlu0 %1143
    %1145 = vrot.lane.b32.xlu0 %v666, 111
    %v1146 = vpop.permute.xlu0 %1145
    %1147 = vrot.lane.b32.xlu0 %v670, 111
    %v1148 = vpop.permute.xlu0 %1147
    %1149 = vrot.lane.b32.xlu0 %v674, 111
    %v1150 = vpop.permute.xlu0 %1149
    %1151 = vrot.lane.b32.xlu0 %v663, 111
    %v1152 = vpop.permute.xlu0 %1151
    %1153 = vrot.lane.b32.xlu0 %v667, 111
    %v1154 = vpop.permute.xlu0 %1153
    %1155 = vrot.lane.b32.xlu0 %v671, 111
    %v1156 = vpop.permute.xlu0 %1155
    %1157 = vrot.lane.b32.xlu0 %v675, 111
    %v1158 = vpop.permute.xlu0 %1157
    %v1159 = vsel %vm345, %v1144, %v1152
    %v1160 = vsel %vm345, %v1146, %v1154
    %v1161 = vsel %vm345, %v1148, %v1156
    %v1162 = vsel %vm345, %v1150, %v1158
    %v1163 = vsel %vm345, %v1136, %v1144
    %v1164 = vsel %vm345, %v1138, %v1146
    %v1165 = vsel %vm345, %v1140, %v1148
    %v1166 = vsel %vm345, %v1142, %v1150
    %v1167 = vsel %vm345, %v1128, %v1136
    %v1168 = vsel %vm345, %v1130, %v1138
    %v1169 = vsel %vm345, %v1132, %v1140
    %v1170 = vsel %vm345, %v1134, %v1142
    %v1171 = vsel %vm345, %v1152, %v1128
    %v1172 = vsel %vm345, %v1154, %v1130
    %v1173 = vsel %vm345, %v1156, %v1132
    %v1174 = vsel %vm345, %v1158, %v1134
    %v1175 = vmul.f32 %v1167, %v350
    %v1176 = vmul.f32 %v1163, %v351
    %v1177 = vmul.f32 %v1159, %v352
    %v1178 = vmul.f32 %v1171, %v353
    %v1179 = vmul.f32 %v1168, %v350
    %v1180 = vmul.f32 %v1164, %v351
    %v1181 = vmul.f32 %v1160, %v352
    %v1182 = vmul.f32 %v1172, %v353
    %v1183 = vmul.f32 %v1169, %v350
    %v1184 = vmul.f32 %v1165, %v351
    %v1185 = vmul.f32 %v1161, %v352
    %v1186 = vmul.f32 %v1173, %v353
    %v1187 = vmul.f32 %v1170, %v350
    %v1188 = vmul.f32 %v1166, %v351
    %v1189 = vmul.f32 %v1162, %v352
    %v1190 = vmul.f32 %v1174, %v353
    %v1191 = vld [vmem:[%s7] sm:$0xff]
    %1193 = vset.pattern.permute.xlu0 0
    %1194 = vperm.xlu0 %1193, %v1191
    %v1195 = vpop.permute.xlu0 %1194
    %v1198 = vsel %vm531, %v678, 0
    %1200 = vmatpush.msra.mxu0 %v931
    %1201 = vmatpush.msra.mxu0 %v927
    %1202 = vmatpush.msra.mxu0 %v923
    %1203 = vmatpush.msra.mxu0 %v919
    %1204 = vmatpush.msra.mxu0 %v867
    %1205 = vmatpush.msra.mxu0 %v863
    %1206 = vmatpush.msra.mxu0 %v859
    %1207 = vmatpush.msra.mxu0 %v855
    %1208 = vmatpush.msra.mxu0 %v803
    %1209 = vmatpush.msra.mxu0 %v799
    %1210 = vmatpush.msra.mxu0 %v795
    %1211 = vmatpush.msra.mxu0 %v791
    %1212 = vmatpush.msra.mxu0 %v739
    %1213 = vmatpush.msra.mxu0 %v735
    %1214 = vmatpush.msra.mxu0 %v731
    %1215 = vmatpush.msra.mxu0 %v727
    %1216 = vmatmul.f32.gmra.mxu0 %v676
    %v1217 = vpop.f32.mrf.mxu0
    %v1218 = vadd.f32 %v1195, %v1217
    %1219 = vdwg.mxu0
    %1220 = vmatpush.msra.mxu0 %v1123
    %1221 = vmatpush.msra.mxu0 %v1119
    %1222 = vmatpush.msra.mxu0 %v1115
    %1223 = vmatpush.msra.mxu0 %v1111
    %1224 = vmatpush.msra.mxu0 %v1059
    %1225 = vmatpush.msra.mxu0 %v1055
    %1226 = vmatpush.msra.mxu0 %v1051
    %1227 = vmatpush.msra.mxu0 %v1047
    %1228 = vmatpush.msra.mxu0 %v995
    %1229 = vmatpush.msra.mxu0 %v991
    %1230 = vmatpush.msra.mxu0 %v987
    %1231 = vmatpush.msra.mxu0 %v983
    %1232 = vmatpush.msra.mxu0 %v672
    %1233 = vmatpush.msra.mxu0 %v668
    %1234 = vmatpush.msra.mxu0 %v664
    %1235 = vmatpush.msra.mxu0 %v660
    %1236 = vmatmul.f32.gmra.mxu0 %v677
    %v1237 = vpop.f32.mrf.mxu0
    %v1238 = vadd.f32 %v1218, %v1237
    %1239 = vdwg.mxu0
    %1240 = vmatpush.msra.mxu0 0.0
    %1241 = vmatpush.msra.mxu0 0.0
    %1242 = vmatpush.msra.mxu0 0.0
    %1243 = vmatpush.msra.mxu0 0.0
    %1244 = vmatpush.msra.mxu0 0.0
    %1245 = vmatpush.msra.mxu0 0.0
    %1246 = vmatpush.msra.mxu0 0.0
    %1247 = vmatpush.msra.mxu0 0.0
    %1248 = vmatpush.msra.mxu0 0.0
    %1249 = vmatpush.msra.mxu0 0.0
    %1250 = vmatpush.msra.mxu0 0.0
    %1251 = vmatpush.msra.mxu0 0.0
    %1252 = vmatpush.msra.mxu0 %v1187
    %1253 = vmatpush.msra.mxu0 %v1183
    %1254 = vmatpush.msra.mxu0 %v1179
    %1255 = vmatpush.msra.mxu0 %v1175
    %1256 = vmatmul.f32.gmra.mxu0 %v1198
    %v1257 = vpop.f32.mrf.mxu0
    %v1258 = vadd.f32 %v1238, %v1257
    %1259 = vdwg.mxu0
    %1260 = vmatpush.msra.mxu0 %v932
    %1261 = vmatpush.msra.mxu0 %v928
    %1262 = vmatpush.msra.mxu0 %v924
    %1263 = vmatpush.msra.mxu0 %v920
    %1264 = vmatpush.msra.mxu0 %v868
    %1265 = vmatpush.msra.mxu0 %v864
    %1266 = vmatpush.msra.mxu0 %v860
    %1267 = vmatpush.msra.mxu0 %v856
    %1268 = vmatpush.msra.mxu0 %v804
    %1269 = vmatpush.msra.mxu0 %v800
    %1270 = vmatpush.msra.mxu0 %v796
    %1271 = vmatpush.msra.mxu0 %v792
    %1272 = vmatpush.msra.mxu0 %v740
    %1273 = vmatpush.msra.mxu0 %v736
    %1274 = vmatpush.msra.mxu0 %v732
    %1275 = vmatpush.msra.mxu0 %v728
    %1276 = vmatmul.f32.gmra.mxu0 %v676
    %v1277 = vpop.f32.mrf.mxu0
    %v1278 = vadd.f32 %v1195, %v1277
    %1279 = vdwg.mxu0
    %1280 = vmatpush.msra.mxu0 %v1124
    %1281 = vmatpush.msra.mxu0 %v1120
    %1282 = vmatpush.msra.mxu0 %v1116
    %1283 = vmatpush.msra.mxu0 %v1112
    %1284 = vmatpush.msra.mxu0 %v1060
    %1285 = vmatpush.msra.mxu0 %v1056
    %1286 = vmatpush.msra.mxu0 %v1052
    %1287 = vmatpush.msra.mxu0 %v1048
    %1288 = vmatpush.msra.mxu0 %v996
    %1289 = vmatpush.msra.mxu0 %v992
    %1290 = vmatpush.msra.mxu0 %v988
    %1291 = vmatpush.msra.mxu0 %v984
    %1292 = vmatpush.msra.mxu0 %v673
    %1293 = vmatpush.msra.mxu0 %v669
    %1294 = vmatpush.msra.mxu0 %v665
    %1295 = vmatpush.msra.mxu0 %v661
    %1296 = vmatmul.f32.gmra.mxu0 %v677
    %v1297 = vpop.f32.mrf.mxu0
    %v1298 = vadd.f32 %v1278, %v1297
    %1299 = vdwg.mxu0
    %1300 = vmatpush.msra.mxu0 0.0
    %1301 = vmatpush.msra.mxu0 0.0
    %1302 = vmatpush.msra.mxu0 0.0
    %1303 = vmatpush.msra.mxu0 0.0
    %1304 = vmatpush.msra.mxu0 0.0
    %1305 = vmatpush.msra.mxu0 0.0
    %1306 = vmatpush.msra.mxu0 0.0
    %1307 = vmatpush.msra.mxu0 0.0
    %1308 = vmatpush.msra.mxu0 0.0
    %1309 = vmatpush.msra.mxu0 0.0
    %1310 = vmatpush.msra.mxu0 0.0
    %1311 = vmatpush.msra.mxu0 0.0
    %1312 = vmatpush.msra.mxu0 %v1188
    %1313 = vmatpush.msra.mxu0 %v1184
    %1314 = vmatpush.msra.mxu0 %v1180
    %1315 = vmatpush.msra.mxu0 %v1176
    %1316 = vmatmul.f32.gmra.mxu0 %v1198
    %v1317 = vpop.f32.mrf.mxu0
    %v1318 = vadd.f32 %v1298, %v1317
    %1319 = vdwg.mxu0
    %1320 = vmatpush.msra.mxu0 %v933
    %1321 = vmatpush.msra.mxu0 %v929
    %1322 = vmatpush.msra.mxu0 %v925
    %1323 = vmatpush.msra.mxu0 %v921
    %1324 = vmatpush.msra.mxu0 %v869
    %1325 = vmatpush.msra.mxu0 %v865
    %1326 = vmatpush.msra.mxu0 %v861
    %1327 = vmatpush.msra.mxu0 %v857
    %1328 = vmatpush.msra.mxu0 %v805
    %1329 = vmatpush.msra.mxu0 %v801
    %1330 = vmatpush.msra.mxu0 %v797
    %1331 = vmatpush.msra.mxu0 %v793
    %1332 = vmatpush.msra.mxu0 %v741
    %1333 = vmatpush.msra.mxu0 %v737
    %1334 = vmatpush.msra.mxu0 %v733
    %1335 = vmatpush.msra.mxu0 %v729
    %1336 = vmatmul.f32.gmra.mxu0 %v676
    %v1337 = vpop.f32.mrf.mxu0
    %v1338 = vadd.f32 %v1195, %v1337
    %1339 = vdwg.mxu0
    %1340 = vmatpush.msra.mxu0 %v1125
    %1341 = vmatpush.msra.mxu0 %v1121
    %1342 = vmatpush.msra.mxu0 %v1117
    %1343 = vmatpush.msra.mxu0 %v1113
    %1344 = vmatpush.msra.mxu0 %v1061
    %1345 = vmatpush.msra.mxu0 %v1057
    %1346 = vmatpush.msra.mxu0 %v1053
    %1347 = vmatpush.msra.mxu0 %v1049
    %1348 = vmatpush.msra.mxu0 %v997
    %1349 = vmatpush.msra.mxu0 %v993
    %1350 = vmatpush.msra.mxu0 %v989
    %1351 = vmatpush.msra.mxu0 %v985
    %1352 = vmatpush.msra.mxu0 %v674
    %1353 = vmatpush.msra.mxu0 %v670
    %1354 = vmatpush.msra.mxu0 %v666
    %1355 = vmatpush.msra.mxu0 %v662
    %1356 = vmatmul.f32.gmra.mxu0 %v677
    %v1357 = vpop.f32.mrf.mxu0
    %v1358 = vadd.f32 %v1338, %v1357
    %1359 = vdwg.mxu0
    %1360 = vmatpush.msra.mxu0 0.0
    %1361 = vmatpush.msra.mxu0 0.0
    %1362 = vmatpush.msra.mxu0 0.0
    %1363 = vmatpush.msra.mxu0 0.0
    %1364 = vmatpush.msra.mxu0 0.0
    %1365 = vmatpush.msra.mxu0 0.0
    %1366 = vmatpush.msra.mxu0 0.0
    %1367 = vmatpush.msra.mxu0 0.0
    %1368 = vmatpush.msra.mxu0 0.0
    %1369 = vmatpush.msra.mxu0 0.0
    %1370 = vmatpush.msra.mxu0 0.0
    %1371 = vmatpush.msra.mxu0 0.0
    %1372 = vmatpush.msra.mxu0 %v1189
    %1373 = vmatpush.msra.mxu0 %v1185
    %1374 = vmatpush.msra.mxu0 %v1181
    %1375 = vmatpush.msra.mxu0 %v1177
    %1376 = vmatmul.f32.gmra.mxu0 %v1198
    %v1377 = vpop.f32.mrf.mxu0
    %v1378 = vadd.f32 %v1358, %v1377
    %1379 = vdwg.mxu0
    %1380 = vmatpush.msra.mxu0 %v934
    %1381 = vmatpush.msra.mxu0 %v930
    %1382 = vmatpush.msra.mxu0 %v926
    %1383 = vmatpush.msra.mxu0 %v922
    %1384 = vmatpush.msra.mxu0 %v870
    %1385 = vmatpush.msra.mxu0 %v866
    %1386 = vmatpush.msra.mxu0 %v862
    %1387 = vmatpush.msra.mxu0 %v858
    %1388 = vmatpush.msra.mxu0 %v806
    %1389 = vmatpush.msra.mxu0 %v802
    %1390 = vmatpush.msra.mxu0 %v798
    %1391 = vmatpush.msra.mxu0 %v794
    %1392 = vmatpush.msra.mxu0 %v742
    %1393 = vmatpush.msra.mxu0 %v738
    %1394 = vmatpush.msra.mxu0 %v734
    %1395 = vmatpush.msra.mxu0 %v730
    %1396 = vmatmul.f32.gmra.mxu0 %v676
    %v1397 = vpop.f32.mrf.mxu0
    %v1398 = vadd.f32 %v1195, %v1397
    %1399 = vdwg.mxu0
    %1400 = vmatpush.msra.mxu0 %v1126
    %1401 = vmatpush.msra.mxu0 %v1122
    %1402 = vmatpush.msra.mxu0 %v1118
    %1403 = vmatpush.msra.mxu0 %v1114
    %1404 = vmatpush.msra.mxu0 %v1062
    %1405 = vmatpush.msra.mxu0 %v1058
    %1406 = vmatpush.msra.mxu0 %v1054
    %1407 = vmatpush.msra.mxu0 %v1050
    %1408 = vmatpush.msra.mxu0 %v998
    %1409 = vmatpush.msra.mxu0 %v994
    %1410 = vmatpush.msra.mxu0 %v990
    %1411 = vmatpush.msra.mxu0 %v986
    %1412 = vmatpush.msra.mxu0 %v675
    %1413 = vmatpush.msra.mxu0 %v671
    %1414 = vmatpush.msra.mxu0 %v667
    %1415 = vmatpush.msra.mxu0 %v663
    %1416 = vmatmul.f32.gmra.mxu0 %v677
    %v1417 = vpop.f32.mrf.mxu0
    %v1418 = vadd.f32 %v1398, %v1417
    %1419 = vdwg.mxu0
    %1420 = vmatpush.msra.mxu0 0.0
    %1421 = vmatpush.msra.mxu0 0.0
    %1422 = vmatpush.msra.mxu0 0.0
    %1423 = vmatpush.msra.mxu0 0.0
    %1424 = vmatpush.msra.mxu0 0.0
    %1425 = vmatpush.msra.mxu0 0.0
    %1426 = vmatpush.msra.mxu0 0.0
    %1427 = vmatpush.msra.mxu0 0.0
    %1428 = vmatpush.msra.mxu0 0.0
    %1429 = vmatpush.msra.mxu0 0.0
    %1430 = vmatpush.msra.mxu0 0.0
    %1431 = vmatpush.msra.mxu0 0.0
    %1432 = vmatpush.msra.mxu0 %v1190
    %1433 = vmatpush.msra.mxu0 %v1186
    %1434 = vmatpush.msra.mxu0 %v1182
    %1435 = vmatpush.msra.mxu0 %v1178
    %1436 = vmatmul.f32.gmra.mxu0 %v1198
    %v1437 = vpop.f32.mrf.mxu0
    %v1438 = vadd.f32 %v1418, %v1437
    %1439 = vdwg.mxu0
    %v1440 = vadd.f32 %v113, %v1258
    %v1441 = vadd.f32 %v136, %v1318
    %v1442 = vadd.f32 %v159, %v1378
    %v1443 = vadd.f32 %v182, %v1438
    %1444 = vst [vmem:[#allocation8] sm:$0xff] %v110
    %1445 = vst [vmem:[#allocation8 + $0x8] sm:$0xff] %v133
    %1446 = vst [vmem:[#allocation8 + $0x10] sm:$0xff] %v156
    %1447 = vst [vmem:[#allocation8 + $0x18] sm:$0xff] %v179
    %1448 = vst [vmem:[#allocation8 + $0x20] sm:$0xff] %v1440
    %1449 = vst [vmem:[#allocation8 + $0x28] sm:$0xff] %v1441
    %1450 = vst [vmem:[#allocation8 + $0x30] sm:$0xff] %v1442
    %1451 = vst [vmem:[#allocation8 + $0x38] sm:$0xff] %v1443
    // Predicated region
    $region46: #{tpu_custom_call.1} parent=1 // pred_check
      _
    $region47: #{tpu_custom_call.1} parent=1 // pred_check_branch
      %1453 = sbr.rel (0) target = $region49
    $region48: #{tpu_custom_call.1} parent=1 // pred_region
      %1455 = vsyncadd [#allocation4], 0
      %s1456 = sshll.u32 [#allocation8], 4
      %s1457 = int_to_ptr.vmem [resolvable:$true] %s1456
      %s1458 = sshll.u32 %s8, 4
      %s1459 = int_to_ptr.hbm [resolvable:$true] %s1458
      %1464 = dma.vmem_to_hbm [thread:$0]  %s1457, 1024, %s1459, [#allocation4], 512, 512, 32
    $region49: #{tpu_custom_call.1} parent=1 // pred_fallthru
      _
    // Predicated region
    $region50: #{tpu_custom_call.1} parent=1 // pred_check
      _
    $region51: #{tpu_custom_call.1} parent=1 // pred_check_branch
      %1466 = sbr.rel (0) target = $region53
    $region52: #{tpu_custom_call.1} parent=1 // pred_region
      %1468 = dma.done [#allocation4], 1024
    $region53: #{tpu_custom_call.1} parent=1 // pred_fallthru
      _
    %1469 = vsyncpa [#allocation3], 1
    %1470 = vsyncpa [#allocation6], 1
    %1471 = vsyncpa [#allocation4], 1

</llo_original>
